<compile_context>
chip_gen: v7x
topology: tpu7x:2x2x1
jax: 0.10.0
libtpu: 0.0.40
codegen_flags: <defaults>
</compile_context>

<pallas_src>
import functools

import jax
import jax.numpy as jnp
from jax import lax
from jax.experimental import pallas as pl
from jax.experimental.pallas import tpu as pltpu


def _vgg_block_kernel(*refs, n_layers, maxpool, bt, H, W):
    """Fused Conv3x3(+folded BN)+LeakyReLU x n_layers (+ MaxPool2d(2,2)).

    Layout: activations are (C, L) with L = bt*H*W -- channels on sublanes,
    the flattened pixels of `bt` batch-packed images on lanes.

    refs = [x, tap_mask, (w_mat, bias) * n_layers, (colsel if maxpool), out, stk]
      x        : (C0, L)        batch-packed flattened activations
      tap_mask : (9, L)         1.0 where the shifted source pixel is in-bounds
      w_mat    : (Cout, 9*Cin)  conv weight * BN scale, column = k*Cin + ci
      bias     : (Cout, 1)      folded BatchNorm bias
      colsel   : (W, W//2)      one-hot even-column selector (maxpool only)
      out      : (Clast, bt*H*W) or (Clast, bt*H*W//4)
      stk      : VMEM scratch (9*max_cin, L) holding the 9 shifted tap copies
    """
    x_ref, mask_ref = refs[0], refs[1]
    idx = 2
    layer_refs = []
    for _ in range(n_layers):
        layer_refs.append((refs[idx], refs[idx + 1]))
        idx += 2
    colsel_ref = None
    if maxpool:
        colsel_ref = refs[idx]
        idx += 1
    o_ref = refs[idx]
    stk_ref = refs[idx + 1]

    N = H * W
    L = bt * N

    tmask = mask_ref[...]                          # (9, L) 0/1 border masks
    x = x_ref[...].astype(jnp.float32)             # (C_in, L)

    for (w_ref, b_ref) in layer_refs:
        c_in = x.shape[0]
        # Stack the 9 shifted/masked copies -> (9*c_in, L): the whole conv
        # layer becomes ONE MXU matmul with K = 9*c_in.
        k = 0
        for dy in (-1, 0, 1):
            for dx in (-1, 0, 1):
                t = dy * W + dx                    # flattened source offset
                if t == 0:
                    src = x                        # center tap: no shift/mask
                else:
                    # src[:, n] = x[:, n + t], zeroed where (i+dy, j+dx) falls
                    # outside the image; the same mask also kills cross-image
                    # taps, so batch-packing the lane axis stays exact.
                    src = pltpu.roll(x, shift=(-t) % L, axis=1) * tmask[k:k + 1]
                stk_ref[k * c_in:(k + 1) * c_in, :] = src
                k += 1
        y = jnp.dot(w_ref[...], stk_ref[0:9 * c_in, :],
                    preferred_element_type=jnp.float32)
        y = y + b_ref[...]                         # BatchNorm (scale folded in w)
        y = jnp.maximum(y, 0.1 * y)                # LeakyReLU(0.1)
        # TODO(synk): Dropout2d(p=0.4) is identity in eval mode; training-mode
        # channel dropout and batch-statistics BatchNorm are not reproduced.
        x = y

    if not maxpool:
        o_ref[...] = x.astype(o_ref.dtype)
        return

    # MaxPool2d(2, 2): 2x2 window max via two rolls (valid at every even
    # row/col anchor), then compact anchors row-by-row with a tiny (W, W/2)
    # one-hot selector matmul.  No O(N^2) selection matrix.
    Ho, Wo = H // 2, W // 2
    No = Ho * Wo
    m1 = jnp.maximum(x, pltpu.roll(x, shift=L - 1, axis=1))    # cols n, n+1
    m2 = jnp.maximum(m1, pltpu.roll(m1, shift=L - W, axis=1))  # rows n, n+W
    colsel = colsel_ref[...]                                   # (W, Wo)
    for b in range(bt):
        for a in range(Ho):
            s = b * N + 2 * a * W
            row = m2[:, s:s + W]                               # (C, W)
            pooled = jnp.dot(row, colsel,
                             preferred_element_type=jnp.float32)
            d = b * No + a * Wo
            o_ref[:, d:d + Wo] = pooled.astype(o_ref.dtype)


def _pick_batch_tile(batch, lanes_in, lanes_out):
    """Images packed per grid step: smallest divisor of `batch` keeping both the
    input and output lane dims 128-aligned (dense stores + aligned blocks, and
    the remaining grid steps can be scheduled in parallel across cores);
    otherwise pack the whole batch into a single step."""
    for d in range(1, batch + 1):
        if batch % d:
            continue
        if d == batch or ((d * lanes_in) % 128 == 0 and
                          (d * lanes_out) % 128 == 0):
            return d
    return batch


def vgg_block(x, params, *, maxpool=True, eps=1e-5):
    """Forward pass of VggBlock (eval mode).

    x      : (B, C0, H, W) float32, NCHW (PyTorch layout).
    params : list of (conv_w, gamma, beta, running_mean, running_var), with
             conv_w of shape (Cout, Cin, 3, 3) (PyTorch Conv2d layout).
    """
    B, C0, H, W = x.shape
    N = H * W
    if maxpool:
        assert H % 2 == 0 and W % 2 == 0
        n_out = (H // 2) * (W // 2)
    else:
        n_out = N

    bt = _pick_batch_tile(B, N, n_out)
    grid = (B // bt,)
    L = bt * N

    # Lane-dense, batch-packed activations: lane index = b*H*W + i*W + j.
    x_g = jnp.transpose(x, (1, 0, 2, 3)).reshape(C0, B * N)

    # 0/1 mask per 3x3 tap: 1 where the shifted source pixel is inside the
    # image (tiled over the bt packed images).
    n_idx = jnp.arange(N)
    ii, jj = n_idx // W, n_idx % W
    masks = []
    for dy in (-1, 0, 1):
        for dx in (-1, 0, 1):
            masks.append((ii + dy >= 0) & (ii + dy < H) &
                         (jj + dx >= 0) & (jj + dx < W))
    tap_mask = jnp.tile(jnp.stack(masks).astype(jnp.float32), (1, bt))  # (9, L)

    inputs = [x_g, tap_mask]
    in_specs = [
        pl.BlockSpec((C0, L), lambda g: (0, g)),
        pl.BlockSpec((9, L), lambda g: (0, 0)),
    ]

    c_in = C0
    max_cin = C0
    for (w, gamma, beta, mean, var) in params:
        c_out = w.shape[0]
        assert w.shape == (c_out, c_in, 3, 3)
        scale = gamma / jnp.sqrt(var + eps)
        bias = beta - mean * scale
        # (Cout, Cin, 3, 3) -> (Cout, 9*Cin), column = k*Cin + ci with
        # k = 3*(dy+1) + (dx+1); fold the BN scale into the weights.
        w_mat = jnp.transpose(w, (0, 2, 3, 1)).reshape(c_out, 9 * c_in)
        w_mat = w_mat * scale[:, None]
        inputs += [w_mat, bias.reshape(c_out, 1)]
        in_specs += [
            pl.BlockSpec((c_out, 9 * c_in), lambda g: (0, 0)),
            pl.BlockSpec((c_out, 1), lambda g: (0, 0)),
        ]
        max_cin = max(max_cin, c_in)
        c_in = c_out
    c_last = c_in

    if maxpool:
        colsel = (jnp.arange(W)[:, None] ==
                  2 * jnp.arange(W // 2)[None, :]).astype(jnp.float32)
        inputs.append(colsel)                                   # (W, W//2)
        in_specs.append(pl.BlockSpec((W, W // 2), lambda g: (0, 0)))

    kernel = functools.partial(_vgg_block_kernel, n_layers=len(params),
                               maxpool=maxpool, bt=bt, H=H, W=W)

    out_g = pl.pallas_call(
        kernel,
        out_shape=jax.ShapeDtypeStruct((c_last, B * n_out), x.dtype),
        grid_spec=pltpu.PrefetchScalarGridSpec(
            num_scalar_prefetch=0,
            grid=grid,
            in_specs=in_specs,
            out_specs=pl.BlockSpec((c_last, bt * n_out), lambda g: (0, g)),
            scratch_shapes=[pltpu.VMEM((9 * max_cin, L), jnp.float32)],
        ),
        compiler_params=pltpu.CompilerParams(
            dimension_semantics=("parallel",),
            vmem_limit_bytes=64 * 1024 * 1024,
        ),
    )(*inputs)

    if maxpool:
        out = out_g.reshape(c_last, B, H // 2, W // 2)
    else:
        out = out_g.reshape(c_last, B, H, W)
    return jnp.transpose(out, (1, 0, 2, 3))


def reference_vgg_block(x, params, *, maxpool=True, eps=1e-5):
    """Pure-JAX reference matching the PyTorch forward (eval mode)."""
    for (w, gamma, beta, mean, var) in params:
        x = lax.conv_general_dilated(
            x, w, window_strides=(1, 1), padding=((1, 1), (1, 1)),
            dimension_numbers=("NCHW", "OIHW", "NCHW"))
        scale = gamma / jnp.sqrt(var + eps)
        shift = beta - mean * scale
        x = x * scale[None, :, None, None] + shift[None, :, None, None]
        x = jnp.where(x > 0, x, 0.1 * x)        # LeakyReLU(0.1); Dropout2d = id
    if maxpool:
        x = lax.reduce_window(x, -jnp.inf, lax.max,
                              window_dimensions=(1, 1, 2, 2),
                              window_strides=(1, 1, 2, 2),
                              padding="VALID")
    return x


if __name__ == "__main__":
    # VggBlock(in_ch=(4, 8), out_ch=(8, 8), maxpool=True) on (2, 4, 16, 16).
    B, H, W = 2, 16, 16
    in_ch = (4, 8)
    out_ch = (8, 8)
    eps = 1e-5

    key = jax.random.PRNGKey(0)
    key, x_key = jax.random.split(key)
    x = jax.random.normal(x_key, (B, in_ch[0], H, W), dtype=jnp.float32)

    params = []
    for ci, co in zip(in_ch, out_ch):
        key, kw, kg, kb, km, kv = jax.random.split(key, 6)
        w = jax.random.normal(kw, (co, ci, 3, 3), jnp.float32) / ((9 * ci) ** 0.5)
        gamma = jax.random.uniform(kg, (co,), jnp.float32, 0.5, 1.5)
        beta = jax.random.normal(kb, (co,), jnp.float32) * 0.1
        mean = jax.random.normal(km, (co,), jnp.float32) * 0.1
        var = jax.random.uniform(kv, (co,), jnp.float32, 0.5, 1.5)
        params.append((w, gamma, beta, mean, var))

    out = vgg_block(x, params, maxpool=True, eps=eps)
    out = jax.block_until_ready(out)

    ref = reference_vgg_block(x, params, maxpool=True, eps=eps)
    assert out.shape == (B, out_ch[-1], H // 2, W // 2), out.shape
    max_err = float(jnp.max(jnp.abs(out - ref)))
    assert jnp.allclose(out, ref, atol=1e-4, rtol=1e-4), f"mismatch: {max_err}"

    print("KERNEL_OK")
</pallas_src>

<mosaic_0001>
module attributes {stable_mosaic.version = 11 : i64} {
  func.func @_vgg_block_kernel(%arg0: i32, %arg1: memref<4x512xf32, #tpu.memory_space<vmem>>, %arg2: memref<9x512xf32, #tpu.memory_space<vmem>>, %arg3: memref<8x36xf32, #tpu.memory_space<vmem>>, %arg4: memref<8x1xf32, #tpu.memory_space<vmem>>, %arg5: memref<8x72xf32, #tpu.memory_space<vmem>>, %arg6: memref<8x1xf32, #tpu.memory_space<vmem>>, %arg7: memref<16x8xf32, #tpu.memory_space<vmem>>, %arg8: memref<8x128xf32, #tpu.memory_space<vmem>>, %arg9: memref<72x512xf32, #tpu.memory_space<vmem>>) attributes {dimension_semantics = [#tpu.dimension_semantics<parallel>], iteration_bounds = array<i64: 1>, scalar_prefetch = 0 : i64, scratch_operands = 1 : i64, tpu.core_type = #tpu.core_type<tc>, window_params = [{transform_indices = @transform_0, window_bounds = array<i64: 4, 512>}, {pipeline_mode = #tpu.pipeline_mode<synchronous>, transform_indices = @transform_1, window_bounds = array<i64: 9, 512>}, {pipeline_mode = #tpu.pipeline_mode<synchronous>, transform_indices = @transform_2, window_bounds = array<i64: 8, 36>}, {pipeline_mode = #tpu.pipeline_mode<synchronous>, transform_indices = @transform_3, window_bounds = array<i64: 8, 1>}, {pipeline_mode = #tpu.pipeline_mode<synchronous>, transform_indices = @transform_4, window_bounds = array<i64: 8, 72>}, {pipeline_mode = #tpu.pipeline_mode<synchronous>, transform_indices = @transform_5, window_bounds = array<i64: 8, 1>}, {pipeline_mode = #tpu.pipeline_mode<synchronous>, transform_indices = @transform_6, window_bounds = array<i64: 16, 8>}, {transform_indices = @transform_7, window_bounds = array<i64: 8, 128>}]} {
    %c0 = arith.constant 0 : index
    %c0_0 = arith.constant 0 : index
    %0 = vector.load %arg2[%c0, %c0_0] : memref<9x512xf32, #tpu.memory_space<vmem>>, vector<9x512xf32>
    %c0_1 = arith.constant 0 : index
    %c0_2 = arith.constant 0 : index
    %1 = vector.load %arg1[%c0_1, %c0_2] : memref<4x512xf32, #tpu.memory_space<vmem>>, vector<4x512xf32>
    %c17_i32 = arith.constant 17 : i32
    %2 = tpu.dynamic_rotate %1 by %c17_i32 dim 1 : vector<4x512xf32>, i32 -> vector<4x512xf32>
    %3 = vector.extract_strided_slice %0 {offsets = [0, 0], sizes = [1, 512], strides = [1, 1]} : vector<9x512xf32> to vector<1x512xf32>
    %4 = vector.broadcast %3 : vector<1x512xf32> to vector<4x512xf32>
    %5 = arith.mulf %2, %4 : vector<4x512xf32>
    %c0_3 = arith.constant 0 : index
    %c0_4 = arith.constant 0 : index
    %6 = vector.load %arg9[%c0_3, %c0_4] : memref<72x512xf32, #tpu.memory_space<vmem>>, vector<4x512xf32>
    tpu.vector_store %arg9[%c0_3, %c0_4], %5 {strides = array<i32>} : memref<72x512xf32, #tpu.memory_space<vmem>>, vector<4x512xf32>,
    %c16_i32 = arith.constant 16 : i32
    %7 = tpu.dynamic_rotate %1 by %c16_i32 dim 1 : vector<4x512xf32>, i32 -> vector<4x512xf32>
    %8 = vector.extract_strided_slice %0 {offsets = [1, 0], sizes = [1, 512], strides = [1, 1]} : vector<9x512xf32> to vector<1x512xf32>
    %9 = vector.broadcast %8 : vector<1x512xf32> to vector<4x512xf32>
    %10 = arith.mulf %7, %9 : vector<4x512xf32>
    %c4 = arith.constant 4 : index
    %c0_5 = arith.constant 0 : index
    %11 = vector.load %arg9[%c4, %c0_5] : memref<72x512xf32, #tpu.memory_space<vmem>>, vector<4x512xf32>
    tpu.vector_store %arg9[%c4, %c0_5], %10 {strides = array<i32>} : memref<72x512xf32, #tpu.memory_space<vmem>>, vector<4x512xf32>,
    %c15_i32 = arith.constant 15 : i32
    %12 = tpu.dynamic_rotate %1 by %c15_i32 dim 1 : vector<4x512xf32>, i32 -> vector<4x512xf32>
    %13 = vector.extract_strided_slice %0 {offsets = [2, 0], sizes = [1, 512], strides = [1, 1]} : vector<9x512xf32> to vector<1x512xf32>
    %14 = vector.broadcast %13 : vector<1x512xf32> to vector<4x512xf32>
    %15 = arith.mulf %12, %14 : vector<4x512xf32>
    %c8 = arith.constant 8 : index
    %c0_6 = arith.constant 0 : index
    %16 = vector.load %arg9[%c8, %c0_6] : memref<72x512xf32, #tpu.memory_space<vmem>>, vector<4x512xf32>
    tpu.vector_store %arg9[%c8, %c0_6], %15 {strides = array<i32>} : memref<72x512xf32, #tpu.memory_space<vmem>>, vector<4x512xf32>,
    %c1_i32 = arith.constant 1 : i32
    %17 = tpu.dynamic_rotate %1 by %c1_i32 dim 1 : vector<4x512xf32>, i32 -> vector<4x512xf32>
    %18 = vector.extract_strided_slice %0 {offsets = [3, 0], sizes = [1, 512], strides = [1, 1]} : vector<9x512xf32> to vector<1x512xf32>
    %19 = vector.broadcast %18 : vector<1x512xf32> to vector<4x512xf32>
    %20 = arith.mulf %17, %19 : vector<4x512xf32>
    %c12 = arith.constant 12 : index
    %c0_7 = arith.constant 0 : index
    %21 = vector.load %arg9[%c12, %c0_7] : memref<72x512xf32, #tpu.memory_space<vmem>>, vector<4x512xf32>
    tpu.vector_store %arg9[%c12, %c0_7], %20 {strides = array<i32>} : memref<72x512xf32, #tpu.memory_space<vmem>>, vector<4x512xf32>,
    %c16 = arith.constant 16 : index
    %c0_8 = arith.constant 0 : index
    %22 = vector.load %arg9[%c16, %c0_8] : memref<72x512xf32, #tpu.memory_space<vmem>>, vector<4x512xf32>
    tpu.vector_store %arg9[%c16, %c0_8], %1 {strides = array<i32>} : memref<72x512xf32, #tpu.memory_space<vmem>>, vector<4x512xf32>,
    %c511_i32 = arith.constant 511 : i32
    %23 = tpu.dynamic_rotate %1 by %c511_i32 dim 1 : vector<4x512xf32>, i32 -> vector<4x512xf32>
    %24 = vector.extract_strided_slice %0 {offsets = [5, 0], sizes = [1, 512], strides = [1, 1]} : vector<9x512xf32> to vector<1x512xf32>
    %25 = vector.broadcast %24 : vector<1x512xf32> to vector<4x512xf32>
    %26 = arith.mulf %23, %25 : vector<4x512xf32>
    %c20 = arith.constant 20 : index
    %c0_9 = arith.constant 0 : index
    %27 = vector.load %arg9[%c20, %c0_9] : memref<72x512xf32, #tpu.memory_space<vmem>>, vector<4x512xf32>
    tpu.vector_store %arg9[%c20, %c0_9], %26 {strides = array<i32>} : memref<72x512xf32, #tpu.memory_space<vmem>>, vector<4x512xf32>,
    %c497_i32 = arith.constant 497 : i32
    %28 = tpu.dynamic_rotate %1 by %c497_i32 dim 1 : vector<4x512xf32>, i32 -> vector<4x512xf32>
    %29 = vector.extract_strided_slice %0 {offsets = [6, 0], sizes = [1, 512], strides = [1, 1]} : vector<9x512xf32> to vector<1x512xf32>
    %30 = vector.broadcast %29 : vector<1x512xf32> to vector<4x512xf32>
    %31 = arith.mulf %28, %30 : vector<4x512xf32>
    %c24 = arith.constant 24 : index
    %c0_10 = arith.constant 0 : index
    %32 = vector.load %arg9[%c24, %c0_10] : memref<72x512xf32, #tpu.memory_space<vmem>>, vector<4x512xf32>
    tpu.vector_store %arg9[%c24, %c0_10], %31 {strides = array<i32>} : memref<72x512xf32, #tpu.memory_space<vmem>>, vector<4x512xf32>,
    %c496_i32 = arith.constant 496 : i32
    %33 = tpu.dynamic_rotate %1 by %c496_i32 dim 1 : vector<4x512xf32>, i32 -> vector<4x512xf32>
    %34 = vector.extract_strided_slice %0 {offsets = [7, 0], sizes = [1, 512], strides = [1, 1]} : vector<9x512xf32> to vector<1x512xf32>
    %35 = vector.broadcast %34 : vector<1x512xf32> to vector<4x512xf32>
    %36 = arith.mulf %33, %35 : vector<4x512xf32>
    %c28 = arith.constant 28 : index
    %c0_11 = arith.constant 0 : index
    %37 = vector.load %arg9[%c28, %c0_11] : memref<72x512xf32, #tpu.memory_space<vmem>>, vector<4x512xf32>
    tpu.vector_store %arg9[%c28, %c0_11], %36 {strides = array<i32>} : memref<72x512xf32, #tpu.memory_space<vmem>>, vector<4x512xf32>,
    %c495_i32 = arith.constant 495 : i32
    %38 = tpu.dynamic_rotate %1 by %c495_i32 dim 1 : vector<4x512xf32>, i32 -> vector<4x512xf32>
    %39 = vector.extract_strided_slice %0 {offsets = [8, 0], sizes = [1, 512], strides = [1, 1]} : vector<9x512xf32> to vector<1x512xf32>
    %40 = vector.broadcast %39 : vector<1x512xf32> to vector<4x512xf32>
    %41 = arith.mulf %38, %40 : vector<4x512xf32>
    %c32 = arith.constant 32 : index
    %c0_12 = arith.constant 0 : index
    %42 = vector.load %arg9[%c32, %c0_12] : memref<72x512xf32, #tpu.memory_space<vmem>>, vector<4x512xf32>
    tpu.vector_store %arg9[%c32, %c0_12], %41 {strides = array<i32>} : memref<72x512xf32, #tpu.memory_space<vmem>>, vector<4x512xf32>,
    %c0_13 = arith.constant 0 : index
    %c0_14 = arith.constant 0 : index
    %43 = vector.load %arg3[%c0_13, %c0_14] : memref<8x36xf32, #tpu.memory_space<vmem>>, vector<8x36xf32>
    %c0_15 = arith.constant 0 : index
    %c0_16 = arith.constant 0 : index
    %44 = vector.load %arg9[%c0_15, %c0_16] : memref<72x512xf32, #tpu.memory_space<vmem>>, vector<36x512xf32>
    %cst = arith.constant dense<0.000000e+00> : vector<8x512xf32>
    %45 = tpu.matmul %43, %44, %cst {dimension_numbers = #tpu.dot_dimension_numbers<[1], [0], [0], [1], [0, 0, 1, 1], [], []>} : vector<8x36xf32>, vector<36x512xf32>, vector<8x512xf32> -> vector<8x512xf32>
    %c0_17 = arith.constant 0 : index
    %c0_18 = arith.constant 0 : index
    %46 = vector.load %arg4[%c0_17, %c0_18] : memref<8x1xf32, #tpu.memory_space<vmem>>, vector<8x1xf32>
    %47 = vector.broadcast %46 : vector<8x1xf32> to vector<8x512xf32>
    %48 = arith.addf %45, %47 : vector<8x512xf32>
    %cst_19 = arith.constant 1.000000e-01 : f32
    %49 = vector.broadcast %cst_19 : f32 to vector<8x512xf32>
    %50 = arith.mulf %49, %48 : vector<8x512xf32>
    %51 = arith.maximumf %48, %50 : vector<8x512xf32>
    %c17_i32_20 = arith.constant 17 : i32
    %52 = tpu.dynamic_rotate %51 by %c17_i32_20 dim 1 : vector<8x512xf32>, i32 -> vector<8x512xf32>
    %53 = vector.extract_strided_slice %0 {offsets = [0, 0], sizes = [1, 512], strides = [1, 1]} : vector<9x512xf32> to vector<1x512xf32>
    %54 = vector.broadcast %53 : vector<1x512xf32> to vector<8x512xf32>
    %55 = arith.mulf %52, %54 : vector<8x512xf32>
    %c0_21 = arith.constant 0 : index
    %c0_22 = arith.constant 0 : index
    %56 = vector.load %arg9[%c0_21, %c0_22] : memref<72x512xf32, #tpu.memory_space<vmem>>, vector<8x512xf32>
    tpu.vector_store %arg9[%c0_21, %c0_22], %55 {strides = array<i32>} : memref<72x512xf32, #tpu.memory_space<vmem>>, vector<8x512xf32>,
    %c16_i32_23 = arith.constant 16 : i32
    %57 = tpu.dynamic_rotate %51 by %c16_i32_23 dim 1 : vector<8x512xf32>, i32 -> vector<8x512xf32>
    %58 = vector.extract_strided_slice %0 {offsets = [1, 0], sizes = [1, 512], strides = [1, 1]} : vector<9x512xf32> to vector<1x512xf32>
    %59 = vector.broadcast %58 : vector<1x512xf32> to vector<8x512xf32>
    %60 = arith.mulf %57, %59 : vector<8x512xf32>
    %c8_24 = arith.constant 8 : index
    %c0_25 = arith.constant 0 : index
    %61 = vector.load %arg9[%c8_24, %c0_25] : memref<72x512xf32, #tpu.memory_space<vmem>>, vector<8x512xf32>
    tpu.vector_store %arg9[%c8_24, %c0_25], %60 {strides = array<i32>} : memref<72x512xf32, #tpu.memory_space<vmem>>, vector<8x512xf32>,
    %c15_i32_26 = arith.constant 15 : i32
    %62 = tpu.dynamic_rotate %51 by %c15_i32_26 dim 1 : vector<8x512xf32>, i32 -> vector<8x512xf32>
    %63 = vector.extract_strided_slice %0 {offsets = [2, 0], sizes = [1, 512], strides = [1, 1]} : vector<9x512xf32> to vector<1x512xf32>
    %64 = vector.broadcast %63 : vector<1x512xf32> to vector<8x512xf32>
    %65 = arith.mulf %62, %64 : vector<8x512xf32>
    %c16_27 = arith.constant 16 : index
    %c0_28 = arith.constant 0 : index
    %66 = vector.load %arg9[%c16_27, %c0_28] : memref<72x512xf32, #tpu.memory_space<vmem>>, vector<8x512xf32>
    tpu.vector_store %arg9[%c16_27, %c0_28], %65 {strides = array<i32>} : memref<72x512xf32, #tpu.memory_space<vmem>>, vector<8x512xf32>,
    %c1_i32_29 = arith.constant 1 : i32
    %67 = tpu.dynamic_rotate %51 by %c1_i32_29 dim 1 : vector<8x512xf32>, i32 -> vector<8x512xf32>
    %68 = vector.extract_strided_slice %0 {offsets = [3, 0], sizes = [1, 512], strides = [1, 1]} : vector<9x512xf32> to vector<1x512xf32>
    %69 = vector.broadcast %68 : vector<1x512xf32> to vector<8x512xf32>
    %70 = arith.mulf %67, %69 : vector<8x512xf32>
    %c24_30 = arith.constant 24 : index
    %c0_31 = arith.constant 0 : index
    %71 = vector.load %arg9[%c24_30, %c0_31] : memref<72x512xf32, #tpu.memory_space<vmem>>, vector<8x512xf32>
    tpu.vector_store %arg9[%c24_30, %c0_31], %70 {strides = array<i32>} : memref<72x512xf32, #tpu.memory_space<vmem>>, vector<8x512xf32>,
    %c32_32 = arith.constant 32 : index
    %c0_33 = arith.constant 0 : index
    %72 = vector.load %arg9[%c32_32, %c0_33] : memref<72x512xf32, #tpu.memory_space<vmem>>, vector<8x512xf32>
    tpu.vector_store %arg9[%c32_32, %c0_33], %51 {strides = array<i32>} : memref<72x512xf32, #tpu.memory_space<vmem>>, vector<8x512xf32>,
    %c511_i32_34 = arith.constant 511 : i32
    %73 = tpu.dynamic_rotate %51 by %c511_i32_34 dim 1 : vector<8x512xf32>, i32 -> vector<8x512xf32>
    %74 = vector.extract_strided_slice %0 {offsets = [5, 0], sizes = [1, 512], strides = [1, 1]} : vector<9x512xf32> to vector<1x512xf32>
    %75 = vector.broadcast %74 : vector<1x512xf32> to vector<8x512xf32>
    %76 = arith.mulf %73, %75 : vector<8x512xf32>
    %c40 = arith.constant 40 : index
    %c0_35 = arith.constant 0 : index
    %77 = vector.load %arg9[%c40, %c0_35] : memref<72x512xf32, #tpu.memory_space<vmem>>, vector<8x512xf32>
    tpu.vector_store %arg9[%c40, %c0_35], %76 {strides = array<i32>} : memref<72x512xf32, #tpu.memory_space<vmem>>, vector<8x512xf32>,
    %c497_i32_36 = arith.constant 497 : i32
    %78 = tpu.dynamic_rotate %51 by %c497_i32_36 dim 1 : vector<8x512xf32>, i32 -> vector<8x512xf32>
    %79 = vector.extract_strided_slice %0 {offsets = [6, 0], sizes = [1, 512], strides = [1, 1]} : vector<9x512xf32> to vector<1x512xf32>
    %80 = vector.broadcast %79 : vector<1x512xf32> to vector<8x512xf32>
    %81 = arith.mulf %78, %80 : vector<8x512xf32>
    %c48 = arith.constant 48 : index
    %c0_37 = arith.constant 0 : index
    %82 = vector.load %arg9[%c48, %c0_37] : memref<72x512xf32, #tpu.memory_space<vmem>>, vector<8x512xf32>
    tpu.vector_store %arg9[%c48, %c0_37], %81 {strides = array<i32>} : memref<72x512xf32, #tpu.memory_space<vmem>>, vector<8x512xf32>,
    %c496_i32_38 = arith.constant 496 : i32
    %83 = tpu.dynamic_rotate %51 by %c496_i32_38 dim 1 : vector<8x512xf32>, i32 -> vector<8x512xf32>
    %84 = vector.extract_strided_slice %0 {offsets = [7, 0], sizes = [1, 512], strides = [1, 1]} : vector<9x512xf32> to vector<1x512xf32>
    %85 = vector.broadcast %84 : vector<1x512xf32> to vector<8x512xf32>
    %86 = arith.mulf %83, %85 : vector<8x512xf32>
    %c56 = arith.constant 56 : index
    %c0_39 = arith.constant 0 : index
    %87 = vector.load %arg9[%c56, %c0_39] : memref<72x512xf32, #tpu.memory_space<vmem>>, vector<8x512xf32>
    tpu.vector_store %arg9[%c56, %c0_39], %86 {strides = array<i32>} : memref<72x512xf32, #tpu.memory_space<vmem>>, vector<8x512xf32>,
    %c495_i32_40 = arith.constant 495 : i32
    %88 = tpu.dynamic_rotate %51 by %c495_i32_40 dim 1 : vector<8x512xf32>, i32 -> vector<8x512xf32>
    %89 = vector.extract_strided_slice %0 {offsets = [8, 0], sizes = [1, 512], strides = [1, 1]} : vector<9x512xf32> to vector<1x512xf32>
    %90 = vector.broadcast %89 : vector<1x512xf32> to vector<8x512xf32>
    %91 = arith.mulf %88, %90 : vector<8x512xf32>
    %c64 = arith.constant 64 : index
    %c0_41 = arith.constant 0 : index
    %92 = vector.load %arg9[%c64, %c0_41] : memref<72x512xf32, #tpu.memory_space<vmem>>, vector<8x512xf32>
    tpu.vector_store %arg9[%c64, %c0_41], %91 {strides = array<i32>} : memref<72x512xf32, #tpu.memory_space<vmem>>, vector<8x512xf32>,
    %c0_42 = arith.constant 0 : index
    %c0_43 = arith.constant 0 : index
    %93 = vector.load %arg5[%c0_42, %c0_43] : memref<8x72xf32, #tpu.memory_space<vmem>>, vector<8x72xf32>
    %c0_44 = arith.constant 0 : index
    %c0_45 = arith.constant 0 : index
    %94 = vector.load %arg9[%c0_44, %c0_45] : memref<72x512xf32, #tpu.memory_space<vmem>>, vector<72x512xf32>
    %cst_46 = arith.constant dense<0.000000e+00> : vector<8x512xf32>
    %95 = tpu.matmul %93, %94, %cst_46 {dimension_numbers = #tpu.dot_dimension_numbers<[1], [0], [0], [1], [0, 0, 1, 1], [], []>} : vector<8x72xf32>, vector<72x512xf32>, vector<8x512xf32> -> vector<8x512xf32>
    %c0_47 = arith.constant 0 : index
    %c0_48 = arith.constant 0 : index
    %96 = vector.load %arg6[%c0_47, %c0_48] : memref<8x1xf32, #tpu.memory_space<vmem>>, vector<8x1xf32>
    %97 = vector.broadcast %96 : vector<8x1xf32> to vector<8x512xf32>
    %98 = arith.addf %95, %97 : vector<8x512xf32>
    %cst_49 = arith.constant 1.000000e-01 : f32
    %99 = vector.broadcast %cst_49 : f32 to vector<8x512xf32>
    %100 = arith.mulf %99, %98 : vector<8x512xf32>
    %101 = arith.maximumf %98, %100 : vector<8x512xf32>
    %c511_i32_50 = arith.constant 511 : i32
    %102 = tpu.dynamic_rotate %101 by %c511_i32_50 dim 1 : vector<8x512xf32>, i32 -> vector<8x512xf32>
    %103 = arith.maximumf %101, %102 : vector<8x512xf32>
    %c496_i32_51 = arith.constant 496 : i32
    %104 = tpu.dynamic_rotate %103 by %c496_i32_51 dim 1 : vector<8x512xf32>, i32 -> vector<8x512xf32>
    %105 = arith.maximumf %103, %104 : vector<8x512xf32>
    %c0_52 = arith.constant 0 : index
    %c0_53 = arith.constant 0 : index
    %106 = vector.load %arg7[%c0_52, %c0_53] : memref<16x8xf32, #tpu.memory_space<vmem>>, vector<16x8xf32>
    %107 = vector.extract_strided_slice %105 {offsets = [0, 0], sizes = [8, 16], strides = [1, 1]} : vector<8x512xf32> to vector<8x16xf32>
    %cst_54 = arith.constant dense<0.000000e+00> : vector<8x8xf32>
    %108 = tpu.matmul %107, %106, %cst_54 {dimension_numbers = #tpu.dot_dimension_numbers<[1], [0], [0], [1], [0, 0, 1, 1], [], []>} : vector<8x16xf32>, vector<16x8xf32>, vector<8x8xf32> -> vector<8x8xf32>
    %c0_55 = arith.constant 0 : index
    %c0_56 = arith.constant 0 : index
    %109 = vector.load %arg8[%c0_55, %c0_56] : memref<8x128xf32, #tpu.memory_space<vmem>>, vector<8x8xf32>
    tpu.vector_store %arg8[%c0_55, %c0_56], %108 {strides = array<i32>} : memref<8x128xf32, #tpu.memory_space<vmem>>, vector<8x8xf32>,
    %110 = vector.extract_strided_slice %105 {offsets = [0, 32], sizes = [8, 16], strides = [1, 1]} : vector<8x512xf32> to vector<8x16xf32>
    %cst_57 = arith.constant dense<0.000000e+00> : vector<8x8xf32>
    %111 = tpu.matmul %110, %106, %cst_57 {dimension_numbers = #tpu.dot_dimension_numbers<[1], [0], [0], [1], [0, 0, 1, 1], [], []>} : vector<8x16xf32>, vector<16x8xf32>, vector<8x8xf32> -> vector<8x8xf32>
    %c0_58 = arith.constant 0 : index
    %c8_59 = arith.constant 8 : index
    %112 = vector.load %arg8[%c0_58, %c8_59] : memref<8x128xf32, #tpu.memory_space<vmem>>, vector<8x8xf32>
    tpu.vector_store %arg8[%c0_58, %c8_59], %111 {strides = array<i32>} : memref<8x128xf32, #tpu.memory_space<vmem>>, vector<8x8xf32>,
    %113 = vector.extract_strided_slice %105 {offsets = [0, 64], sizes = [8, 16], strides = [1, 1]} : vector<8x512xf32> to vector<8x16xf32>
    %cst_60 = arith.constant dense<0.000000e+00> : vector<8x8xf32>
    %114 = tpu.matmul %113, %106, %cst_60 {dimension_numbers = #tpu.dot_dimension_numbers<[1], [0], [0], [1], [0, 0, 1, 1], [], []>} : vector<8x16xf32>, vector<16x8xf32>, vector<8x8xf32> -> vector<8x8xf32>
    %c0_61 = arith.constant 0 : index
    %c16_62 = arith.constant 16 : index
    %115 = vector.load %arg8[%c0_61, %c16_62] : memref<8x128xf32, #tpu.memory_space<vmem>>, vector<8x8xf32>
    tpu.vector_store %arg8[%c0_61, %c16_62], %114 {strides = array<i32>} : memref<8x128xf32, #tpu.memory_space<vmem>>, vector<8x8xf32>,
    %116 = vector.extract_strided_slice %105 {offsets = [0, 96], sizes = [8, 16], strides = [1, 1]} : vector<8x512xf32> to vector<8x16xf32>
    %cst_63 = arith.constant dense<0.000000e+00> : vector<8x8xf32>
    %117 = tpu.matmul %116, %106, %cst_63 {dimension_numbers = #tpu.dot_dimension_numbers<[1], [0], [0], [1], [0, 0, 1, 1], [], []>} : vector<8x16xf32>, vector<16x8xf32>, vector<8x8xf32> -> vector<8x8xf32>
    %c0_64 = arith.constant 0 : index
    %c24_65 = arith.constant 24 : index
    %118 = vector.load %arg8[%c0_64, %c24_65] : memref<8x128xf32, #tpu.memory_space<vmem>>, vector<8x8xf32>
    tpu.vector_store %arg8[%c0_64, %c24_65], %117 {strides = array<i32>} : memref<8x128xf32, #tpu.memory_space<vmem>>, vector<8x8xf32>,
    %119 = vector.extract_strided_slice %105 {offsets = [0, 128], sizes = [8, 16], strides = [1, 1]} : vector<8x512xf32> to vector<8x16xf32>
    %cst_66 = arith.constant dense<0.000000e+00> : vector<8x8xf32>
    %120 = tpu.matmul %119, %106, %cst_66 {dimension_numbers = #tpu.dot_dimension_numbers<[1], [0], [0], [1], [0, 0, 1, 1], [], []>} : vector<8x16xf32>, vector<16x8xf32>, vector<8x8xf32> -> vector<8x8xf32>
    %c0_67 = arith.constant 0 : index
    %c32_68 = arith.constant 32 : index
    %121 = vector.load %arg8[%c0_67, %c32_68] : memref<8x128xf32, #tpu.memory_space<vmem>>, vector<8x8xf32>
    tpu.vector_store %arg8[%c0_67, %c32_68], %120 {strides = array<i32>} : memref<8x128xf32, #tpu.memory_space<vmem>>, vector<8x8xf32>,
    %122 = vector.extract_strided_slice %105 {offsets = [0, 160], sizes = [8, 16], strides = [1, 1]} : vector<8x512xf32> to vector<8x16xf32>
    %cst_69 = arith.constant dense<0.000000e+00> : vector<8x8xf32>
    %123 = tpu.matmul %122, %106, %cst_69 {dimension_numbers = #tpu.dot_dimension_numbers<[1], [0], [0], [1], [0, 0, 1, 1], [], []>} : vector<8x16xf32>, vector<16x8xf32>, vector<8x8xf32> -> vector<8x8xf32>
    %c0_70 = arith.constant 0 : index
    %c40_71 = arith.constant 40 : index
    %124 = vector.load %arg8[%c0_70, %c40_71] : memref<8x128xf32, #tpu.memory_space<vmem>>, vector<8x8xf32>
    tpu.vector_store %arg8[%c0_70, %c40_71], %123 {strides = array<i32>} : memref<8x128xf32, #tpu.memory_space<vmem>>, vector<8x8xf32>,
    %125 = vector.extract_strided_slice %105 {offsets = [0, 192], sizes = [8, 16], strides = [1, 1]} : vector<8x512xf32> to vector<8x16xf32>
    %cst_72 = arith.constant dense<0.000000e+00> : vector<8x8xf32>
    %126 = tpu.matmul %125, %106, %cst_72 {dimension_numbers = #tpu.dot_dimension_numbers<[1], [0], [0], [1], [0, 0, 1, 1], [], []>} : vector<8x16xf32>, vector<16x8xf32>, vector<8x8xf32> -> vector<8x8xf32>
    %c0_73 = arith.constant 0 : index
    %c48_74 = arith.constant 48 : index
    %127 = vector.load %arg8[%c0_73, %c48_74] : memref<8x128xf32, #tpu.memory_space<vmem>>, vector<8x8xf32>
    tpu.vector_store %arg8[%c0_73, %c48_74], %126 {strides = array<i32>} : memref<8x128xf32, #tpu.memory_space<vmem>>, vector<8x8xf32>,
    %128 = vector.extract_strided_slice %105 {offsets = [0, 224], sizes = [8, 16], strides = [1, 1]} : vector<8x512xf32> to vector<8x16xf32>
    %cst_75 = arith.constant dense<0.000000e+00> : vector<8x8xf32>
    %129 = tpu.matmul %128, %106, %cst_75 {dimension_numbers = #tpu.dot_dimension_numbers<[1], [0], [0], [1], [0, 0, 1, 1], [], []>} : vector<8x16xf32>, vector<16x8xf32>, vector<8x8xf32> -> vector<8x8xf32>
    %c0_76 = arith.constant 0 : index
    %c56_77 = arith.constant 56 : index
    %130 = vector.load %arg8[%c0_76, %c56_77] : memref<8x128xf32, #tpu.memory_space<vmem>>, vector<8x8xf32>
    tpu.vector_store %arg8[%c0_76, %c56_77], %129 {strides = array<i32>} : memref<8x128xf32, #tpu.memory_space<vmem>>, vector<8x8xf32>,
    %131 = vector.extract_strided_slice %105 {offsets = [0, 256], sizes = [8, 16], strides = [1, 1]} : vector<8x512xf32> to vector<8x16xf32>
    %cst_78 = arith.constant dense<0.000000e+00> : vector<8x8xf32>
    %132 = tpu.matmul %131, %106, %cst_78 {dimension_numbers = #tpu.dot_dimension_numbers<[1], [0], [0], [1], [0, 0, 1, 1], [], []>} : vector<8x16xf32>, vector<16x8xf32>, vector<8x8xf32> -> vector<8x8xf32>
    %c0_79 = arith.constant 0 : index
    %c64_80 = arith.constant 64 : index
    %133 = vector.load %arg8[%c0_79, %c64_80] : memref<8x128xf32, #tpu.memory_space<vmem>>, vector<8x8xf32>
    tpu.vector_store %arg8[%c0_79, %c64_80], %132 {strides = array<i32>} : memref<8x128xf32, #tpu.memory_space<vmem>>, vector<8x8xf32>,
    %134 = vector.extract_strided_slice %105 {offsets = [0, 288], sizes = [8, 16], strides = [1, 1]} : vector<8x512xf32> to vector<8x16xf32>
    %cst_81 = arith.constant dense<0.000000e+00> : vector<8x8xf32>
    %135 = tpu.matmul %134, %106, %cst_81 {dimension_numbers = #tpu.dot_dimension_numbers<[1], [0], [0], [1], [0, 0, 1, 1], [], []>} : vector<8x16xf32>, vector<16x8xf32>, vector<8x8xf32> -> vector<8x8xf32>
    %c0_82 = arith.constant 0 : index
    %c72 = arith.constant 72 : index
    %136 = vector.load %arg8[%c0_82, %c72] : memref<8x128xf32, #tpu.memory_space<vmem>>, vector<8x8xf32>
    tpu.vector_store %arg8[%c0_82, %c72], %135 {strides = array<i32>} : memref<8x128xf32, #tpu.memory_space<vmem>>, vector<8x8xf32>,
    %137 = vector.extract_strided_slice %105 {offsets = [0, 320], sizes = [8, 16], strides = [1, 1]} : vector<8x512xf32> to vector<8x16xf32>
    %cst_83 = arith.constant dense<0.000000e+00> : vector<8x8xf32>
    %138 = tpu.matmul %137, %106, %cst_83 {dimension_numbers = #tpu.dot_dimension_numbers<[1], [0], [0], [1], [0, 0, 1, 1], [], []>} : vector<8x16xf32>, vector<16x8xf32>, vector<8x8xf32> -> vector<8x8xf32>
    %c0_84 = arith.constant 0 : index
    %c80 = arith.constant 80 : index
    %139 = vector.load %arg8[%c0_84, %c80] : memref<8x128xf32, #tpu.memory_space<vmem>>, vector<8x8xf32>
    tpu.vector_store %arg8[%c0_84, %c80], %138 {strides = array<i32>} : memref<8x128xf32, #tpu.memory_space<vmem>>, vector<8x8xf32>,
    %140 = vector.extract_strided_slice %105 {offsets = [0, 352], sizes = [8, 16], strides = [1, 1]} : vector<8x512xf32> to vector<8x16xf32>
    %cst_85 = arith.constant dense<0.000000e+00> : vector<8x8xf32>
    %141 = tpu.matmul %140, %106, %cst_85 {dimension_numbers = #tpu.dot_dimension_numbers<[1], [0], [0], [1], [0, 0, 1, 1], [], []>} : vector<8x16xf32>, vector<16x8xf32>, vector<8x8xf32> -> vector<8x8xf32>
    %c0_86 = arith.constant 0 : index
    %c88 = arith.constant 88 : index
    %142 = vector.load %arg8[%c0_86, %c88] : memref<8x128xf32, #tpu.memory_space<vmem>>, vector<8x8xf32>
    tpu.vector_store %arg8[%c0_86, %c88], %141 {strides = array<i32>} : memref<8x128xf32, #tpu.memory_space<vmem>>, vector<8x8xf32>,
    %143 = vector.extract_strided_slice %105 {offsets = [0, 384], sizes = [8, 16], strides = [1, 1]} : vector<8x512xf32> to vector<8x16xf32>
    %cst_87 = arith.constant dense<0.000000e+00> : vector<8x8xf32>
    %144 = tpu.matmul %143, %106, %cst_87 {dimension_numbers = #tpu.dot_dimension_numbers<[1], [0], [0], [1], [0, 0, 1, 1], [], []>} : vector<8x16xf32>, vector<16x8xf32>, vector<8x8xf32> -> vector<8x8xf32>
    %c0_88 = arith.constant 0 : index
    %c96 = arith.constant 96 : index
    %145 = vector.load %arg8[%c0_88, %c96] : memref<8x128xf32, #tpu.memory_space<vmem>>, vector<8x8xf32>
    tpu.vector_store %arg8[%c0_88, %c96], %144 {strides = array<i32>} : memref<8x128xf32, #tpu.memory_space<vmem>>, vector<8x8xf32>,
    %146 = vector.extract_strided_slice %105 {offsets = [0, 416], sizes = [8, 16], strides = [1, 1]} : vector<8x512xf32> to vector<8x16xf32>
    %cst_89 = arith.constant dense<0.000000e+00> : vector<8x8xf32>
    %147 = tpu.matmul %146, %106, %cst_89 {dimension_numbers = #tpu.dot_dimension_numbers<[1], [0], [0], [1], [0, 0, 1, 1], [], []>} : vector<8x16xf32>, vector<16x8xf32>, vector<8x8xf32> -> vector<8x8xf32>
    %c0_90 = arith.constant 0 : index
    %c104 = arith.constant 104 : index
    %148 = vector.load %arg8[%c0_90, %c104] : memref<8x128xf32, #tpu.memory_space<vmem>>, vector<8x8xf32>
    tpu.vector_store %arg8[%c0_90, %c104], %147 {strides = array<i32>} : memref<8x128xf32, #tpu.memory_space<vmem>>, vector<8x8xf32>,
    %149 = vector.extract_strided_slice %105 {offsets = [0, 448], sizes = [8, 16], strides = [1, 1]} : vector<8x512xf32> to vector<8x16xf32>
    %cst_91 = arith.constant dense<0.000000e+00> : vector<8x8xf32>
    %150 = tpu.matmul %149, %106, %cst_91 {dimension_numbers = #tpu.dot_dimension_numbers<[1], [0], [0], [1], [0, 0, 1, 1], [], []>} : vector<8x16xf32>, vector<16x8xf32>, vector<8x8xf32> -> vector<8x8xf32>
    %c0_92 = arith.constant 0 : index
    %c112 = arith.constant 112 : index
    %151 = vector.load %arg8[%c0_92, %c112] : memref<8x128xf32, #tpu.memory_space<vmem>>, vector<8x8xf32>
    tpu.vector_store %arg8[%c0_92, %c112], %150 {strides = array<i32>} : memref<8x128xf32, #tpu.memory_space<vmem>>, vector<8x8xf32>,
    %152 = vector.extract_strided_slice %105 {offsets = [0, 480], sizes = [8, 16], strides = [1, 1]} : vector<8x512xf32> to vector<8x16xf32>
    %cst_93 = arith.constant dense<0.000000e+00> : vector<8x8xf32>
    %153 = tpu.matmul %152, %106, %cst_93 {dimension_numbers = #tpu.dot_dimension_numbers<[1], [0], [0], [1], [0, 0, 1, 1], [], []>} : vector<8x16xf32>, vector<16x8xf32>, vector<8x8xf32> -> vector<8x8xf32>
    %c0_94 = arith.constant 0 : index
    %c120 = arith.constant 120 : index
    %154 = vector.load %arg8[%c0_94, %c120] : memref<8x128xf32, #tpu.memory_space<vmem>>, vector<8x8xf32>
    tpu.vector_store %arg8[%c0_94, %c120], %153 {strides = array<i32>} : memref<8x128xf32, #tpu.memory_space<vmem>>, vector<8x8xf32>,
    return
  }
  func.func @transform_0(%arg0: i32) -> (i32, i32) {
    %c0_i32 = arith.constant 0 : i32
    %c0_i32_0 = arith.constant 0 : i32
    return %c0_i32, %arg0 : i32, i32
  }
  func.func @transform_1(%arg0: i32) -> (i32, i32) {
    %c0_i32 = arith.constant 0 : i32
    %c0_i32_0 = arith.constant 0 : i32
    %c0_i32_1 = arith.constant 0 : i32
    return %c0_i32, %c0_i32_0 : i32, i32
  }
  func.func @transform_2(%arg0: i32) -> (i32, i32) {
    %c0_i32 = arith.constant 0 : i32
    %c0_i32_0 = arith.constant 0 : i32
    %c0_i32_1 = arith.constant 0 : i32
    return %c0_i32, %c0_i32_0 : i32, i32
  }
  func.func @transform_3(%arg0: i32) -> (i32, i32) {
    %c0_i32 = arith.constant 0 : i32
    %c0_i32_0 = arith.constant 0 : i32
    %c0_i32_1 = arith.constant 0 : i32
    return %c0_i32, %c0_i32_0 : i32, i32
  }
  func.func @transform_4(%arg0: i32) -> (i32, i32) {
    %c0_i32 = arith.constant 0 : i32
    %c0_i32_0 = arith.constant 0 : i32
    %c0_i32_1 = arith.constant 0 : i32
    return %c0_i32, %c0_i32_0 : i32, i32
  }
  func.func @transform_5(%arg0: i32) -> (i32, i32) {
    %c0_i32 = arith.constant 0 : i32
    %c0_i32_0 = arith.constant 0 : i32
    %c0_i32_1 = arith.constant 0 : i32
    return %c0_i32, %c0_i32_0 : i32, i32
  }
  func.func @transform_6(%arg0: i32) -> (i32, i32) {
    %c0_i32 = arith.constant 0 : i32
    %c0_i32_0 = arith.constant 0 : i32
    %c0_i32_1 = arith.constant 0 : i32
    return %c0_i32, %c0_i32_0 : i32, i32
  }
  func.func @transform_7(%arg0: i32) -> (i32, i32) {
    %c0_i32 = arith.constant 0 : i32
    %c0_i32_0 = arith.constant 0 : i32
    return %c0_i32, %arg0 : i32, i32
  }
}

</mosaic_0001>

<llo_original>
// kernel: tpu_custom_call.1
$region0: #{tpu_custom_call.1}
  #allocation0 [shape = 'u32[]', space=smem, size = 0x4, offset = 0x4, fixed_abs, tag = 'smem constant byte address 0x4 - core index']
  #allocation1 [shape = 'u32[144,128]{1,0:T(1,128)}', space=vmem, size = 0x12000, scoped, tag = 'internal scratch']
  #allocation2 [shape = 'f32[72,512]{1,0:T(8,128)}', space=vmem, size = 0x24000, scoped, tag = 'scratch operand']
  %s0 = inlined_call_operand.hbm [shape: f32[4,512], index: 0, kind: input, shape index: {}]
  %s1 = inlined_call_operand.hbm [shape: f32[9,512], index: 1, kind: input, shape index: {}]
  %s2 = inlined_call_operand.hbm [shape: f32[8,36], index: 2, kind: input, shape index: {}]
  %s3 = inlined_call_operand.hbm [shape: f32[8,1], index: 3, kind: input, shape index: {}]
  %s4 = inlined_call_operand.hbm [shape: f32[8,72], index: 4, kind: input, shape index: {}]
  %s5 = inlined_call_operand.hbm [shape: f32[8,1], index: 5, kind: input, shape index: {}]
  %s6 = inlined_call_operand.hbm [shape: f32[16,8], index: 6, kind: input, shape index: {}]
  %s7 = inlined_call_operand.hbm [shape: f32[8,128], index: 7, kind: output, shape index: {}]
  %s8 = sld [smem:[#allocation0]]
  $region66: #{tpu_custom_call.1} parent=0
    _
  %s10 = ssub.s32 1, %s8
  %s11 = scalar_select 0, %s10, %s8
  $region1: #{tpu_custom_call.1} parent=0
    #allocation3 [shape = 'u8[8192]{0}', space=vmem, size = 0x2000, scoped, tag = 'input window, operand 0, single buffered']
    #allocation4 [shape = 's32[1]{0}', space=sflag, size = 0x4, scoped, tag = 'scoped memory for tpu_custom_call.1']
    #allocation5 [shape = 's32[1]{0}', space=sflag, size = 0x4, scoped, tag = 'scoped memory for tpu_custom_call.1']
    #allocation6 [shape = 'u8[32768]{0}', space=vmem, size = 0x8000, scoped, tag = 'input window, operand 1, single buffered']
    #allocation7 [shape = 's32[1]{0}', space=sflag, size = 0x4, scoped, tag = 'scoped memory for tpu_custom_call.1']
    #allocation8 [shape = 'u8[4096]{0}', space=vmem, size = 0x1000, scoped, tag = 'input window, operand 2, single buffered']
    #allocation9 [shape = 'u8[4096]{0}', space=vmem, size = 0x1000, scoped, tag = 'input window, operand 3, single buffered']
    #allocation10 [shape = 's32[1]{0}', space=sflag, size = 0x4, scoped, tag = 'scoped memory for tpu_custom_call.1']
    #allocation11 [shape = 'u8[4096]{0}', space=vmem, size = 0x1000, scoped, tag = 'input window, operand 4, single buffered']
    #allocation12 [shape = 'u8[4096]{0}', space=vmem, size = 0x1000, scoped, tag = 'input window, operand 5, single buffered']
    #allocation13 [shape = 's32[1]{0}', space=sflag, size = 0x4, scoped, tag = 'scoped memory for tpu_custom_call.1']
    #allocation14 [shape = 'u8[8192]{0}', space=vmem, size = 0x2000, scoped, tag = 'input window, operand 6, single buffered']
    #allocation15 [shape = 'u8[4096]{0}', space=vmem, size = 0x1000, scoped, tag = 'output window, operand 0, single buffered']
    %12 = vsyncpa [#allocation4], 0
    %13 = vsyncpa [#allocation7], 0
    %14 = vsyncpa [#allocation10], 0
    %15 = vsyncpa [#allocation13], 0
    %16 = vsyncpa [#allocation5], 0
    // Predicated region
    $region2: #{tpu_custom_call.1} parent=1 // pred_check
      _
    $region3: #{tpu_custom_call.1} parent=1 // pred_check_branch
      %18 = sbr.rel (0) target = $region5
    $region4: #{tpu_custom_call.1} parent=1 // pred_region
      %s20 = ssub.s32 256, 256
      %21 = vsyncadd [#allocation4], %s20
      %s23 = sshll.u32 [#allocation3], 4
      %s24 = int_to_ptr.vmem [resolvable:$true] %s23
      %26 = dma.hbm_to_vmem [thread:$0]  %s0, 256, %s24, [#allocation4]
    $region5: #{tpu_custom_call.1} parent=1 // pred_fallthru
      _
    // Predicated region
    $region6: #{tpu_custom_call.1} parent=1 // pred_check
      _
    $region7: #{tpu_custom_call.1} parent=1 // pred_check_branch
      %28 = sbr.rel (0) target = $region9
    $region8: #{tpu_custom_call.1} parent=1 // pred_region
      %s30 = ssub.s32 1024, 1024
      %31 = vsyncadd [#allocation7], %s30
      %s32 = sshll.u32 [#allocation6], 4
      %s33 = int_to_ptr.vmem [resolvable:$true] %s32
      %38 = dma.hbm_to_vmem [thread:$0]  %s1, 1024, %s33, [#allocation7], 512, 512, 32
    $region9: #{tpu_custom_call.1} parent=1 // pred_fallthru
      _
    // Predicated region
    $region10: #{tpu_custom_call.1} parent=1 // pred_check
      _
    $region11: #{tpu_custom_call.1} parent=1 // pred_check_branch
      %40 = sbr.rel (0) target = $region13
    $region12: #{tpu_custom_call.1} parent=1 // pred_region
      %s42 = ssub.s32 128, 128
      %43 = vsyncadd [#allocation7], %s42
      %s45 = sshll.u32 [#allocation8], 4
      %s46 = int_to_ptr.vmem [resolvable:$true] %s45
      %48 = dma.hbm_to_vmem [thread:$0]  %s2, 128, %s46, [#allocation7]
    $region13: #{tpu_custom_call.1} parent=1 // pred_fallthru
      _
    // Predicated region
    $region14: #{tpu_custom_call.1} parent=1 // pred_check
      _
    $region15: #{tpu_custom_call.1} parent=1 // pred_check_branch
      %50 = sbr.rel (0) target = $region17
    $region16: #{tpu_custom_call.1} parent=1 // pred_region
      %s52 = ssub.s32 128, 128
      %53 = vsyncadd [#allocation10], %s52
      %s55 = sshll.u32 [#allocation9], 4
      %s56 = int_to_ptr.vmem [resolvable:$true] %s55
      %58 = dma.hbm_to_vmem [thread:$0]  %s3, 128, %s56, [#allocation10]
    $region17: #{tpu_custom_call.1} parent=1 // pred_fallthru
      _
    // Predicated region
    $region18: #{tpu_custom_call.1} parent=1 // pred_check
      _
    $region19: #{tpu_custom_call.1} parent=1 // pred_check_branch
      %60 = sbr.rel (0) target = $region21
    $region20: #{tpu_custom_call.1} parent=1 // pred_region
      %s62 = ssub.s32 128, 128
      %63 = vsyncadd [#allocation10], %s62
      %s65 = sshll.u32 [#allocation11], 4
      %s66 = int_to_ptr.vmem [resolvable:$true] %s65
      %68 = dma.hbm_to_vmem [thread:$0]  %s4, 128, %s66, [#allocation10]
    $region21: #{tpu_custom_call.1} parent=1 // pred_fallthru
      _
    // Predicated region
    $region22: #{tpu_custom_call.1} parent=1 // pred_check
      _
    $region23: #{tpu_custom_call.1} parent=1 // pred_check_branch
      %70 = sbr.rel (0) target = $region25
    $region24: #{tpu_custom_call.1} parent=1 // pred_region
      %s72 = ssub.s32 128, 128
      %73 = vsyncadd [#allocation13], %s72
      %s75 = sshll.u32 [#allocation12], 4
      %s76 = int_to_ptr.vmem [resolvable:$true] %s75
      %78 = dma.hbm_to_vmem [thread:$0]  %s5, 128, %s76, [#allocation13]
    $region25: #{tpu_custom_call.1} parent=1 // pred_fallthru
      _
    // Predicated region
    $region26: #{tpu_custom_call.1} parent=1 // pred_check
      _
    $region27: #{tpu_custom_call.1} parent=1 // pred_check_branch
      %80 = sbr.rel (0) target = $region29
    $region28: #{tpu_custom_call.1} parent=1 // pred_region
      %s82 = ssub.s32 256, 256
      %83 = vsyncadd [#allocation13], %s82
      %s84 = sshll.u32 [#allocation14], 4
      %s85 = int_to_ptr.vmem [resolvable:$true] %s84
      %90 = dma.hbm_to_vmem [thread:$0]  %s6, 256, %s85, [#allocation13], 128, 128, 8
    $region29: #{tpu_custom_call.1} parent=1 // pred_fallthru
      _
    // Predicated region
    $region30: #{tpu_custom_call.1} parent=1 // pred_check
      _
    $region31: #{tpu_custom_call.1} parent=1 // pred_check_branch
      %92 = sbr.rel (0) target = $region33
    $region32: #{tpu_custom_call.1} parent=1 // pred_region
      %93 = dma.done [#allocation4], 256
    $region33: #{tpu_custom_call.1} parent=1 // pred_fallthru
      _
    // Predicated region
    $region34: #{tpu_custom_call.1} parent=1 // pred_check
      _
    $region35: #{tpu_custom_call.1} parent=1 // pred_check_branch
      %95 = sbr.rel (0) target = $region37
    $region36: #{tpu_custom_call.1} parent=1 // pred_region
      %96 = dma.done [#allocation7], 1024
    $region37: #{tpu_custom_call.1} parent=1 // pred_fallthru
      _
    // Predicated region
    $region38: #{tpu_custom_call.1} parent=1 // pred_check
      _
    $region39: #{tpu_custom_call.1} parent=1 // pred_check_branch
      %98 = sbr.rel (0) target = $region41
    $region40: #{tpu_custom_call.1} parent=1 // pred_region
      %99 = dma.done [#allocation7], 128
    $region41: #{tpu_custom_call.1} parent=1 // pred_fallthru
      _
    // Predicated region
    $region42: #{tpu_custom_call.1} parent=1 // pred_check
      _
    $region43: #{tpu_custom_call.1} parent=1 // pred_check_branch
      %101 = sbr.rel (0) target = $region45
    $region44: #{tpu_custom_call.1} parent=1 // pred_region
      %102 = dma.done [#allocation10], 128
    $region45: #{tpu_custom_call.1} parent=1 // pred_fallthru
      _
    // Predicated region
    $region46: #{tpu_custom_call.1} parent=1 // pred_check
      _
    $region47: #{tpu_custom_call.1} parent=1 // pred_check_branch
      %104 = sbr.rel (0) target = $region49
    $region48: #{tpu_custom_call.1} parent=1 // pred_region
      %105 = dma.done [#allocation10], 128
    $region49: #{tpu_custom_call.1} parent=1 // pred_fallthru
      _
    // Predicated region
    $region50: #{tpu_custom_call.1} parent=1 // pred_check
      _
    $region51: #{tpu_custom_call.1} parent=1 // pred_check_branch
      %107 = sbr.rel (0) target = $region53
    $region52: #{tpu_custom_call.1} parent=1 // pred_region
      %108 = dma.done [#allocation13], 128
    $region53: #{tpu_custom_call.1} parent=1 // pred_fallthru
      _
    // Predicated region
    $region54: #{tpu_custom_call.1} parent=1 // pred_check
      _
    $region55: #{tpu_custom_call.1} parent=1 // pred_check_branch
      %110 = sbr.rel (0) target = $region57
    $region56: #{tpu_custom_call.1} parent=1 // pred_region
      %111 = dma.done [#allocation13], 256
    $region57: #{tpu_custom_call.1} parent=1 // pred_fallthru
      _
    %v112 = vld [vmem:[#allocation6] sm:$0xff]
    %v113 = vld [vmem:[#allocation6 + $0x8] sm:$0xff]
    %v114 = vld [vmem:[#allocation6 + $0x10] sm:$0xff]
    %v115 = vld [vmem:[#allocation6 + $0x18] sm:$0xff]
    %v116 = vld [vmem:[#allocation6 + $0x20] sm:$0x1]
    %v117 = vld [vmem:[#allocation6 + $0x28] sm:$0x1]
    %v118 = vld [vmem:[#allocation6 + $0x30] sm:$0x1]
    %v119 = vld [vmem:[#allocation6 + $0x38] sm:$0x1]
    %v120 = vld [vmem:[#allocation3] sm:$0xff]
    %v121 = vld [vmem:[#allocation3 + $0x8] sm:$0xff]
    %v124 = vcombine.high %v120, %v120
    %v125 = vcombine.high %v121, %v121
    %128 = vrot.lane.b32.xlu0 %v120, 17
    %v129 = vpop.permute.xlu0 %128
    %130 = vrot.lane.b32.xlu0 %v124, 17
    %v131 = vpop.permute.xlu0 %130
    %132 = vrot.lane.b32.xlu0 %v121, 17
    %v133 = vpop.permute.xlu0 %132
    %134 = vrot.lane.b32.xlu0 %v125, 17
    %v135 = vpop.permute.xlu0 %134
    %v136 = vlaneseq
    %v137 = vand.u32 %v136, 127
    %vm138 = vcmp.lt.s32.totalorder %v137, 17
    %v139 = vsel %vm138, %v133, %v135
    %v140 = vsel %vm138, %v131, %v133
    %v141 = vsel %vm138, %v129, %v131
    %v142 = vsel %vm138, %v135, %v129
    %v143 = vlaneseq
    %v144 = vshrl.u32 %v143, 7
    %v145 = vsub.s32 0, %v144
    %v146 = vrot.slane %v112, %v145
    %v147 = vlaneseq
    %v148 = vshrl.u32 %v147, 7
    %v149 = vsub.s32 0, %v148
    %v150 = vrot.slane %v113, %v149
    %v151 = vlaneseq
    %v152 = vshrl.u32 %v151, 7
    %v153 = vsub.s32 0, %v152
    %v154 = vrot.slane %v114, %v153
    %v155 = vlaneseq
    %v156 = vshrl.u32 %v155, 7
    %v157 = vsub.s32 0, %v156
    %v158 = vrot.slane %v115, %v157
    %v159 = vmul.f32 %v142, %v146
    %v160 = vmul.f32 %v141, %v150
    %v161 = vmul.f32 %v140, %v154
    %v162 = vmul.f32 %v139, %v158
    %163 = vst [vmem:[#allocation2] sm:$0xf] %v159
    %164 = vst [vmem:[#allocation2 + $0x8] sm:$0xf] %v160
    %165 = vst [vmem:[#allocation2 + $0x10] sm:$0xf] %v161
    %166 = vst [vmem:[#allocation2 + $0x18] sm:$0xf] %v162
    %167 = vrot.lane.b32.xlu0 %v120, 16
    %v168 = vpop.permute.xlu0 %167
    %169 = vrot.lane.b32.xlu0 %v124, 16
    %v170 = vpop.permute.xlu0 %169
    %171 = vrot.lane.b32.xlu0 %v121, 16
    %v172 = vpop.permute.xlu0 %171
    %173 = vrot.lane.b32.xlu0 %v125, 16
    %v174 = vpop.permute.xlu0 %173
    %vm175 = vcmp.lt.s32.totalorder %v137, 16
    %v176 = vsel %vm175, %v172, %v174
    %v177 = vsel %vm175, %v170, %v172
    %v178 = vsel %vm175, %v168, %v170
    %v179 = vsel %vm175, %v174, %v168
    %v180 = vlaneseq
    %v181 = vshrl.u32 %v180, 7
    %v182 = vsub.s32 1, %v181
    %v183 = vrot.slane %v112, %v182
    %v184 = vlaneseq
    %v185 = vshrl.u32 %v184, 7
    %v186 = vsub.s32 1, %v185
    %v187 = vrot.slane %v113, %v186
    %v188 = vlaneseq
    %v189 = vshrl.u32 %v188, 7
    %v190 = vsub.s32 1, %v189
    %v191 = vrot.slane %v114, %v190
    %v192 = vlaneseq
    %v193 = vshrl.u32 %v192, 7
    %v194 = vsub.s32 1, %v193
    %v195 = vrot.slane %v115, %v194
    %v196 = vmul.f32 %v179, %v183
    %v197 = vmul.f32 %v178, %v187
    %v198 = vmul.f32 %v177, %v191
    %v199 = vmul.f32 %v176, %v195
    %v204 = vrot.slane %v196, 4
    %v205 = vrot.slane %v197, 4
    %v206 = vrot.slane %v198, 4
    %v207 = vrot.slane %v199, 4
    %212 = vst [vmem:[#allocation2] sm:$0xf0] %v204
    %213 = vst [vmem:[#allocation2 + $0x8] sm:$0xf0] %v205
    %214 = vst [vmem:[#allocation2 + $0x10] sm:$0xf0] %v206
    %215 = vst [vmem:[#allocation2 + $0x18] sm:$0xf0] %v207
    %216 = vrot.lane.b32.xlu0 %v120, 15
    %v217 = vpop.permute.xlu0 %216
    %218 = vrot.lane.b32.xlu0 %v124, 15
    %v219 = vpop.permute.xlu0 %218
    %220 = vrot.lane.b32.xlu0 %v121, 15
    %v221 = vpop.permute.xlu0 %220
    %222 = vrot.lane.b32.xlu0 %v125, 15
    %v223 = vpop.permute.xlu0 %222
    %vm224 = vcmp.lt.s32.totalorder %v137, 15
    %v225 = vsel %vm224, %v221, %v223
    %v226 = vsel %vm224, %v219, %v221
    %v227 = vsel %vm224, %v217, %v219
    %v228 = vsel %vm224, %v223, %v217
    %v229 = vlaneseq
    %v230 = vshrl.u32 %v229, 7
    %v231 = vsub.s32 2, %v230
    %v232 = vrot.slane %v112, %v231
    %v233 = vlaneseq
    %v234 = vshrl.u32 %v233, 7
    %v235 = vsub.s32 2, %v234
    %v236 = vrot.slane %v113, %v235
    %v237 = vlaneseq
    %v238 = vshrl.u32 %v237, 7
    %v239 = vsub.s32 2, %v238
    %v240 = vrot.slane %v114, %v239
    %v241 = vlaneseq
    %v242 = vshrl.u32 %v241, 7
    %v243 = vsub.s32 2, %v242
    %v244 = vrot.slane %v115, %v243
    %v245 = vmul.f32 %v228, %v232
    %v246 = vmul.f32 %v227, %v236
    %v247 = vmul.f32 %v226, %v240
    %v248 = vmul.f32 %v225, %v244
    %249 = vst [vmem:[#allocation2 + $0x20] sm:$0xf] %v245
    %250 = vst [vmem:[#allocation2 + $0x28] sm:$0xf] %v246
    %251 = vst [vmem:[#allocation2 + $0x30] sm:$0xf] %v247
    %252 = vst [vmem:[#allocation2 + $0x38] sm:$0xf] %v248
    %253 = vrot.lane.b32.xlu0 %v120, 1
    %v254 = vpop.permute.xlu0 %253
    %255 = vrot.lane.b32.xlu0 %v124, 1
    %v256 = vpop.permute.xlu0 %255
    %257 = vrot.lane.b32.xlu0 %v121, 1
    %v258 = vpop.permute.xlu0 %257
    %259 = vrot.lane.b32.xlu0 %v125, 1
    %v260 = vpop.permute.xlu0 %259
    %vm261 = vcmp.lt.s32.totalorder %v137, 1
    %v262 = vsel %vm261, %v258, %v260
    %v263 = vsel %vm261, %v256, %v258
    %v264 = vsel %vm261, %v254, %v256
    %v265 = vsel %vm261, %v260, %v254
    %v266 = vlaneseq
    %v267 = vshrl.u32 %v266, 7
    %v268 = vsub.s32 3, %v267
    %v269 = vrot.slane %v112, %v268
    %v270 = vlaneseq
    %v271 = vshrl.u32 %v270, 7
    %v272 = vsub.s32 3, %v271
    %v273 = vrot.slane %v113, %v272
    %v274 = vlaneseq
    %v275 = vshrl.u32 %v274, 7
    %v276 = vsub.s32 3, %v275
    %v277 = vrot.slane %v114, %v276
    %v278 = vlaneseq
    %v279 = vshrl.u32 %v278, 7
    %v280 = vsub.s32 3, %v279
    %v281 = vrot.slane %v115, %v280
    %v282 = vmul.f32 %v265, %v269
    %v283 = vmul.f32 %v264, %v273
    %v284 = vmul.f32 %v263, %v277
    %v285 = vmul.f32 %v262, %v281
    %v290 = vrot.slane %v282, 4
    %v291 = vrot.slane %v283, 4
    %v292 = vrot.slane %v284, 4
    %v293 = vrot.slane %v285, 4
    %298 = vst [vmem:[#allocation2 + $0x20] sm:$0xf0] %v290
    %299 = vst [vmem:[#allocation2 + $0x28] sm:$0xf0] %v291
    %300 = vst [vmem:[#allocation2 + $0x30] sm:$0xf0] %v292
    %301 = vst [vmem:[#allocation2 + $0x38] sm:$0xf0] %v293
    %302 = vst [vmem:[#allocation2 + $0x40] sm:$0xf] %v120
    %303 = vst [vmem:[#allocation2 + $0x48] sm:$0xf] %v124
    %304 = vst [vmem:[#allocation2 + $0x50] sm:$0xf] %v121
    %305 = vst [vmem:[#allocation2 + $0x58] sm:$0xf] %v125
    %306 = vrot.lane.b32.xlu0 %v120, 127
    %v307 = vpop.permute.xlu0 %306
    %308 = vrot.lane.b32.xlu0 %v124, 127
    %v309 = vpop.permute.xlu0 %308
    %310 = vrot.lane.b32.xlu0 %v121, 127
    %v311 = vpop.permute.xlu0 %310
    %312 = vrot.lane.b32.xlu0 %v125, 127
    %v313 = vpop.permute.xlu0 %312
    %vm314 = vcmp.lt.s32.totalorder %v137, 127
    %v315 = vsel %vm314, %v311, %v313
    %v316 = vsel %vm314, %v309, %v311
    %v317 = vsel %vm314, %v307, %v309
    %v318 = vsel %vm314, %v313, %v307
    %v319 = vlaneseq
    %v320 = vshrl.u32 %v319, 7
    %v321 = vsub.s32 5, %v320
    %v322 = vrot.slane %v112, %v321
    %v323 = vlaneseq
    %v324 = vshrl.u32 %v323, 7
    %v325 = vsub.s32 5, %v324
    %v326 = vrot.slane %v113, %v325
    %v327 = vlaneseq
    %v328 = vshrl.u32 %v327, 7
    %v329 = vsub.s32 5, %v328
    %v330 = vrot.slane %v114, %v329
    %v331 = vlaneseq
    %v332 = vshrl.u32 %v331, 7
    %v333 = vsub.s32 5, %v332
    %v334 = vrot.slane %v115, %v333
    %v335 = vmul.f32 %v317, %v322
    %v336 = vmul.f32 %v316, %v326
    %v337 = vmul.f32 %v315, %v330
    %v338 = vmul.f32 %v318, %v334
    %v343 = vrot.slane %v335, 4
    %v344 = vrot.slane %v336, 4
    %v345 = vrot.slane %v337, 4
    %v346 = vrot.slane %v338, 4
    %351 = vst [vmem:[#allocation2 + $0x40] sm:$0xf0] %v343
    %352 = vst [vmem:[#allocation2 + $0x48] sm:$0xf0] %v344
    %353 = vst [vmem:[#allocation2 + $0x50] sm:$0xf0] %v345
    %354 = vst [vmem:[#allocation2 + $0x58] sm:$0xf0] %v346
    %355 = vrot.lane.b32.xlu0 %v120, 113
    %v356 = vpop.permute.xlu0 %355
    %357 = vrot.lane.b32.xlu0 %v124, 113
    %v358 = vpop.permute.xlu0 %357
    %359 = vrot.lane.b32.xlu0 %v121, 113
    %v360 = vpop.permute.xlu0 %359
    %361 = vrot.lane.b32.xlu0 %v125, 113
    %v362 = vpop.permute.xlu0 %361
    %vm363 = vcmp.lt.s32.totalorder %v137, 113
    %v364 = vsel %vm363, %v360, %v362
    %v365 = vsel %vm363, %v358, %v360
    %v366 = vsel %vm363, %v356, %v358
    %v367 = vsel %vm363, %v362, %v356
    %v368 = vlaneseq
    %v369 = vshrl.u32 %v368, 7
    %v370 = vsub.s32 6, %v369
    %v371 = vrot.slane %v112, %v370
    %v372 = vlaneseq
    %v373 = vshrl.u32 %v372, 7
    %v374 = vsub.s32 6, %v373
    %v375 = vrot.slane %v113, %v374
    %v376 = vlaneseq
    %v377 = vshrl.u32 %v376, 7
    %v378 = vsub.s32 6, %v377
    %v379 = vrot.slane %v114, %v378
    %v380 = vlaneseq
    %v381 = vshrl.u32 %v380, 7
    %v382 = vsub.s32 6, %v381
    %v383 = vrot.slane %v115, %v382
    %v384 = vmul.f32 %v366, %v371
    %v385 = vmul.f32 %v365, %v375
    %v386 = vmul.f32 %v364, %v379
    %v387 = vmul.f32 %v367, %v383
    %388 = vst [vmem:[#allocation2 + $0x60] sm:$0xf] %v384
    %389 = vst [vmem:[#allocation2 + $0x68] sm:$0xf] %v385
    %390 = vst [vmem:[#allocation2 + $0x70] sm:$0xf] %v386
    %391 = vst [vmem:[#allocation2 + $0x78] sm:$0xf] %v387
    %392 = vrot.lane.b32.xlu0 %v120, 112
    %v393 = vpop.permute.xlu0 %392
    %394 = vrot.lane.b32.xlu0 %v124, 112
    %v395 = vpop.permute.xlu0 %394
    %396 = vrot.lane.b32.xlu0 %v121, 112
    %v397 = vpop.permute.xlu0 %396
    %398 = vrot.lane.b32.xlu0 %v125, 112
    %v399 = vpop.permute.xlu0 %398
    %vm400 = vcmp.lt.s32.totalorder %v137, 112
    %v401 = vsel %vm400, %v397, %v399
    %v402 = vsel %vm400, %v395, %v397
    %v403 = vsel %vm400, %v393, %v395
    %v404 = vsel %vm400, %v399, %v393
    %v405 = vlaneseq
    %v406 = vshrl.u32 %v405, 7
    %v407 = vsub.s32 7, %v406
    %v408 = vrot.slane %v112, %v407
    %v409 = vlaneseq
    %v410 = vshrl.u32 %v409, 7
    %v411 = vsub.s32 7, %v410
    %v412 = vrot.slane %v113, %v411
    %v413 = vlaneseq
    %v414 = vshrl.u32 %v413, 7
    %v415 = vsub.s32 7, %v414
    %v416 = vrot.slane %v114, %v415
    %v417 = vlaneseq
    %v418 = vshrl.u32 %v417, 7
    %v419 = vsub.s32 7, %v418
    %v420 = vrot.slane %v115, %v419
    %v421 = vmul.f32 %v403, %v408
    %v422 = vmul.f32 %v402, %v412
    %v423 = vmul.f32 %v401, %v416
    %v424 = vmul.f32 %v404, %v420
    %v429 = vrot.slane %v421, 4
    %v430 = vrot.slane %v422, 4
    %v431 = vrot.slane %v423, 4
    %v432 = vrot.slane %v424, 4
    %437 = vst [vmem:[#allocation2 + $0x60] sm:$0xf0] %v429
    %438 = vst [vmem:[#allocation2 + $0x68] sm:$0xf0] %v430
    %439 = vst [vmem:[#allocation2 + $0x70] sm:$0xf0] %v431
    %440 = vst [vmem:[#allocation2 + $0x78] sm:$0xf0] %v432
    %441 = vrot.lane.b32.xlu0 %v120, 111
    %v442 = vpop.permute.xlu0 %441
    %443 = vrot.lane.b32.xlu0 %v124, 111
    %v444 = vpop.permute.xlu0 %443
    %445 = vrot.lane.b32.xlu0 %v121, 111
    %v446 = vpop.permute.xlu0 %445
    %447 = vrot.lane.b32.xlu0 %v125, 111
    %v448 = vpop.permute.xlu0 %447
    %vm449 = vcmp.lt.s32.totalorder %v137, 111
    %v450 = vsel %vm449, %v446, %v448
    %v451 = vsel %vm449, %v444, %v446
    %v452 = vsel %vm449, %v442, %v444
    %v453 = vsel %vm449, %v448, %v442
    %v454 = vlaneseq
    %v455 = vshrl.u32 %v454, 7
    %v456 = vsub.s32 0, %v455
    %v457 = vrot.slane %v116, %v456
    %v458 = vlaneseq
    %v459 = vshrl.u32 %v458, 7
    %v460 = vsub.s32 0, %v459
    %v461 = vrot.slane %v117, %v460
    %v462 = vlaneseq
    %v463 = vshrl.u32 %v462, 7
    %v464 = vsub.s32 0, %v463
    %v465 = vrot.slane %v118, %v464
    %v466 = vlaneseq
    %v467 = vshrl.u32 %v466, 7
    %v468 = vsub.s32 0, %v467
    %v469 = vrot.slane %v119, %v468
    %v470 = vmul.f32 %v452, %v457
    %v471 = vmul.f32 %v451, %v461
    %v472 = vmul.f32 %v450, %v465
    %v473 = vmul.f32 %v453, %v469
    %474 = vst [vmem:[#allocation2 + $0x80] sm:$0xf] %v470
    %475 = vst [vmem:[#allocation2 + $0x88] sm:$0xf] %v471
    %476 = vst [vmem:[#allocation2 + $0x90] sm:$0xf] %v472
    %477 = vst [vmem:[#allocation2 + $0x98] sm:$0xf] %v473
    %v478 = vld [vmem:[#allocation8] sm:$0xff]
    %v479 = vld [vmem:[#allocation2] sm:$0xff]
    %v480 = vld [vmem:[#allocation2 + $0x8] sm:$0xff]
    %v481 = vld [vmem:[#allocation2 + $0x10] sm:$0xff]
    %v482 = vld [vmem:[#allocation2 + $0x18] sm:$0xff]
    %v483 = vld [vmem:[#allocation2 + $0x20] sm:$0xff]
    %v484 = vld [vmem:[#allocation2 + $0x28] sm:$0xff]
    %v485 = vld [vmem:[#allocation2 + $0x30] sm:$0xff]
    %v486 = vld [vmem:[#allocation2 + $0x38] sm:$0xff]
    %v487 = vld [vmem:[#allocation2 + $0x40] sm:$0xff]
    %v488 = vld [vmem:[#allocation2 + $0x48] sm:$0xff]
    %v489 = vld [vmem:[#allocation2 + $0x50] sm:$0xff]
    %v490 = vld [vmem:[#allocation2 + $0x58] sm:$0xff]
    %v491 = vld [vmem:[#allocation2 + $0x60] sm:$0xff]
    %v492 = vld [vmem:[#allocation2 + $0x68] sm:$0xff]
    %v493 = vld [vmem:[#allocation2 + $0x70] sm:$0xff]
    %v494 = vld [vmem:[#allocation2 + $0x78] sm:$0xff]
    %v495 = vld [vmem:[#allocation2 + $0x80] sm:$0xf]
    %v496 = vld [vmem:[#allocation2 + $0x88] sm:$0xf]
    %v497 = vld [vmem:[#allocation2 + $0x90] sm:$0xf]
    %v498 = vld [vmem:[#allocation2 + $0x98] sm:$0xf]
    %v499 = vld [vmem:[#allocation9] sm:$0xff]
    %501 = vset.pattern.permute.xlu0 0
    %502 = vperm.xlu0 %501, %v499
    %v503 = vpop.permute.xlu0 %502
    %vm505 = vcmask 293888
    %v507 = vsel %vm505, %v478, 0
    %vm509 = vcmask 1043456
    %v511 = vsel %vm509, %v495, 0
    %v514 = vsel %vm509, %v496, 0
    %v517 = vsel %vm509, %v497, 0
    %v520 = vsel %vm509, %v498, 0
    %522 = vmatprep.subr.mxu0 %v480
    %523 = vmatpush1.msra.mxu0 %v479
    %524 = vmatprep.subr.mxu0 %v484
    %525 = vmatpush1.msra.mxu0 %v483
    %526 = vmatprep.subr.mxu0 %v488
    %527 = vmatpush1.msra.mxu0 %v487
    %528 = vmatprep.subr.mxu0 %v492
    %529 = vmatpush1.msra.mxu0 %v491
    %530 = vmatprep.subr.mxu0 %v514
    %531 = vmatpush1.msra.mxu0 %v511
    %532 = vmatprep.subr.mxu0 0.0
    %533 = vmatpush1.msra.mxu0 0.0
    %534 = vmatprep.subr.mxu0 0.0
    %535 = vmatpush1.msra.mxu0 0.0
    %536 = vmatprep.subr.mxu0 0.0
    %537 = vmatpush1.msra.mxu0 0.0
    %538 = vmatprep.subr.mxu0 0.0
    %539 = vmatpush1.msra.mxu0 0.0
    %540 = vmatprep.subr.mxu0 0.0
    %541 = vmatpush1.msra.mxu0 0.0
    %542 = vmatprep.subr.mxu0 0.0
    %543 = vmatpush1.msra.mxu0 0.0
    %544 = vmatprep.subr.mxu0 0.0
    %545 = vmatpush1.msra.mxu0 0.0
    %546 = vmatprep.subr.mxu0 0.0
    %547 = vmatpush1.msra.mxu0 0.0
    %548 = vmatprep.subr.mxu0 0.0
    %549 = vmatpush1.msra.mxu0 0.0
    %550 = vmatprep.subr.mxu0 0.0
    %551 = vmatpush1.msra.mxu0 0.0
    %552 = vmatprep.subr.mxu0 0.0
    %553 = vmatpush1.msra.mxu0 0.0
    %554 = vmatprep.subr.mxu0 0.0
    %555 = vmatpush1.msra.mxu0 0.0
    %556 = vmatprep.subr.mxu0 0.0
    %557 = vmatpush1.msra.mxu0 0.0
    %558 = vmatprep.subr.mxu0 0.0
    %559 = vmatpush1.msra.mxu0 0.0
    %560 = vmatprep.subr.mxu0 0.0
    %561 = vmatpush1.msra.mxu0 0.0
    %562 = vmatprep.subr.mxu0 0.0
    %563 = vmatpush1.msra.mxu0 0.0
    %564 = vmatprep.subr.mxu0 0.0
    %565 = vmatpush1.msra.mxu0 0.0
    %566 = vmatprep.subr.mxu0 0.0
    %567 = vmatpush1.msra.mxu0 0.0
    %568 = vmatprep.subr.mxu0 0.0
    %569 = vmatpush1.msra.mxu0 0.0
    %570 = vmatprep.subr.mxu0 0.0
    %571 = vmatpush1.msra.mxu0 0.0
    %572 = vmatprep.subr.mxu0 0.0
    %573 = vmatpush1.msra.mxu0 0.0
    %574 = vmatprep.subr.mxu0 0.0
    %575 = vmatpush1.msra.mxu0 0.0
    %576 = vmatprep.subr.mxu0 0.0
    %577 = vmatpush1.msra.mxu0 0.0
    %578 = vmatprep.subr.mxu0 0.0
    %579 = vmatpush1.msra.mxu0 0.0
    %580 = vmatprep.subr.mxu0 0.0
    %581 = vmatpush1.msra.mxu0 0.0
    %582 = vmatprep.subr.mxu0 0.0
    %583 = vmatpush1.msra.mxu0 0.0
    %584 = vmatprep.subr.mxu0 0.0
    %585 = vmatpush1.msra.mxu0 0.0
    %586 = vmatprep.mubr.f32.mxu0 0.0
    %587 = vmatmul.mubr.f32.gmra.mrb[0].mxu0 %v507
    %v588 = vpop.f32.mrb[0].mxu0
    %v589 = vadd.f32 %v503, %v588
    %v590 = vpop.f32.mrb[0].mxu0
    %v591 = vadd.f32 %v503, %v590
    %592 = vdwg.mxu0
    %593 = vmatprep.subr.mxu0 %v482
    %594 = vmatpush1.msra.mxu0 %v481
    %595 = vmatprep.subr.mxu0 %v486
    %596 = vmatpush1.msra.mxu0 %v485
    %597 = vmatprep.subr.mxu0 %v490
    %598 = vmatpush1.msra.mxu0 %v489
    %599 = vmatprep.subr.mxu0 %v494
    %600 = vmatpush1.msra.mxu0 %v493
    %601 = vmatprep.subr.mxu0 %v520
    %602 = vmatpush1.msra.mxu0 %v517
    %603 = vmatprep.subr.mxu0 0.0
    %604 = vmatpush1.msra.mxu0 0.0
    %605 = vmatprep.subr.mxu0 0.0
    %606 = vmatpush1.msra.mxu0 0.0
    %607 = vmatprep.subr.mxu0 0.0
    %608 = vmatpush1.msra.mxu0 0.0
    %609 = vmatprep.subr.mxu0 0.0
    %610 = vmatpush1.msra.mxu0 0.0
    %611 = vmatprep.subr.mxu0 0.0
    %612 = vmatpush1.msra.mxu0 0.0
    %613 = vmatprep.subr.mxu0 0.0
    %614 = vmatpush1.msra.mxu0 0.0
    %615 = vmatprep.subr.mxu0 0.0
    %616 = vmatpush1.msra.mxu0 0.0
    %617 = vmatprep.subr.mxu0 0.0
    %618 = vmatpush1.msra.mxu0 0.0
    %619 = vmatprep.subr.mxu0 0.0
    %620 = vmatpush1.msra.mxu0 0.0
    %621 = vmatprep.subr.mxu0 0.0
    %622 = vmatpush1.msra.mxu0 0.0
    %623 = vmatprep.subr.mxu0 0.0
    %624 = vmatpush1.msra.mxu0 0.0
    %625 = vmatprep.subr.mxu0 0.0
    %626 = vmatpush1.msra.mxu0 0.0
    %627 = vmatprep.subr.mxu0 0.0
    %628 = vmatpush1.msra.mxu0 0.0
    %629 = vmatprep.subr.mxu0 0.0
    %630 = vmatpush1.msra.mxu0 0.0
    %631 = vmatprep.subr.mxu0 0.0
    %632 = vmatpush1.msra.mxu0 0.0
    %633 = vmatprep.subr.mxu0 0.0
    %634 = vmatpush1.msra.mxu0 0.0
    %635 = vmatprep.subr.mxu0 0.0
    %636 = vmatpush1.msra.mxu0 0.0
    %637 = vmatprep.subr.mxu0 0.0
    %638 = vmatpush1.msra.mxu0 0.0
    %639 = vmatprep.subr.mxu0 0.0
    %640 = vmatpush1.msra.mxu0 0.0
    %641 = vmatprep.subr.mxu0 0.0
    %642 = vmatpush1.msra.mxu0 0.0
    %643 = vmatprep.subr.mxu0 0.0
    %644 = vmatpush1.msra.mxu0 0.0
    %645 = vmatprep.subr.mxu0 0.0
    %646 = vmatpush1.msra.mxu0 0.0
    %647 = vmatprep.subr.mxu0 0.0
    %648 = vmatpush1.msra.mxu0 0.0
    %649 = vmatprep.subr.mxu0 0.0
    %650 = vmatpush1.msra.mxu0 0.0
    %651 = vmatprep.subr.mxu0 0.0
    %652 = vmatpush1.msra.mxu0 0.0
    %653 = vmatprep.subr.mxu0 0.0
    %654 = vmatpush1.msra.mxu0 0.0
    %655 = vmatprep.subr.mxu0 0.0
    %656 = vmatpush1.msra.mxu0 0.0
    %657 = vmatprep.mubr.f32.mxu0 0.0
    %658 = vmatmul.mubr.f32.gmra.mrb[0].mxu0 %v507
    %v659 = vpop.f32.mrb[0].mxu0
    %v660 = vadd.f32 %v503, %v659
    %v661 = vpop.f32.mrb[0].mxu0
    %v662 = vadd.f32 %v503, %v661
    %663 = vdwg.mxu0
    %v664 = vmul.f32 %v589, 0.1
    %v665 = vmul.f32 %v591, 0.1
    %v666 = vmul.f32 %v660, 0.1
    %v667 = vmul.f32 %v662, 0.1
    %v668 = vmax.f32 %v589, %v664
    %v669 = vmax.f32 %v591, %v665
    %v670 = vmax.f32 %v660, %v666
    %v671 = vmax.f32 %v662, %v667
    %672 = vrot.lane.b32.xlu0 %v668, 17
    %v673 = vpop.permute.xlu0 %672
    %674 = vrot.lane.b32.xlu0 %v669, 17
    %v675 = vpop.permute.xlu0 %674
    %676 = vrot.lane.b32.xlu0 %v670, 17
    %v677 = vpop.permute.xlu0 %676
    %678 = vrot.lane.b32.xlu0 %v671, 17
    %v679 = vpop.permute.xlu0 %678
    %v680 = vsel %vm138, %v677, %v679
    %v681 = vsel %vm138, %v675, %v677
    %v682 = vsel %vm138, %v673, %v675
    %v683 = vsel %vm138, %v679, %v673
    %v684 = vmul.f32 %v683, %v146
    %v685 = vmul.f32 %v682, %v150
    %v686 = vmul.f32 %v681, %v154
    %v687 = vmul.f32 %v680, %v158
    %688 = vst [vmem:[#allocation2] sm:$0xff] %v684
    %689 = vst [vmem:[#allocation2 + $0x8] sm:$0xff] %v685
    %690 = vst [vmem:[#allocation2 + $0x10] sm:$0xff] %v686
    %691 = vst [vmem:[#allocation2 + $0x18] sm:$0xff] %v687
    %692 = vrot.lane.b32.xlu0 %v668, 16
    %v693 = vpop.permute.xlu0 %692
    %694 = vrot.lane.b32.xlu0 %v669, 16
    %v695 = vpop.permute.xlu0 %694
    %696 = vrot.lane.b32.xlu0 %v670, 16
    %v697 = vpop.permute.xlu0 %696
    %698 = vrot.lane.b32.xlu0 %v671, 16
    %v699 = vpop.permute.xlu0 %698
    %v700 = vsel %vm175, %v697, %v699
    %v701 = vsel %vm175, %v695, %v697
    %v702 = vsel %vm175, %v693, %v695
    %v703 = vsel %vm175, %v699, %v693
    %v704 = vmul.f32 %v703, %v183
    %v705 = vmul.f32 %v702, %v187
    %v706 = vmul.f32 %v701, %v191
    %v707 = vmul.f32 %v700, %v195
    %708 = vst [vmem:[#allocation2 + $0x20] sm:$0xff] %v704
    %709 = vst [vmem:[#allocation2 + $0x28] sm:$0xff] %v705
    %710 = vst [vmem:[#allocation2 + $0x30] sm:$0xff] %v706
    %711 = vst [vmem:[#allocation2 + $0x38] sm:$0xff] %v707
    %712 = vrot.lane.b32.xlu0 %v668, 15
    %v713 = vpop.permute.xlu0 %712
    %714 = vrot.lane.b32.xlu0 %v669, 15
    %v715 = vpop.permute.xlu0 %714
    %716 = vrot.lane.b32.xlu0 %v670, 15
    %v717 = vpop.permute.xlu0 %716
    %718 = vrot.lane.b32.xlu0 %v671, 15
    %v719 = vpop.permute.xlu0 %718
    %v720 = vsel %vm224, %v717, %v719
    %v721 = vsel %vm224, %v715, %v717
    %v722 = vsel %vm224, %v713, %v715
    %v723 = vsel %vm224, %v719, %v713
    %v724 = vmul.f32 %v723, %v232
    %v725 = vmul.f32 %v722, %v236
    %v726 = vmul.f32 %v721, %v240
    %v727 = vmul.f32 %v720, %v244
    %728 = vst [vmem:[#allocation2 + $0x40] sm:$0xff] %v724
    %729 = vst [vmem:[#allocation2 + $0x48] sm:$0xff] %v725
    %730 = vst [vmem:[#allocation2 + $0x50] sm:$0xff] %v726
    %731 = vst [vmem:[#allocation2 + $0x58] sm:$0xff] %v727
    %732 = vrot.lane.b32.xlu0 %v668, 1
    %v733 = vpop.permute.xlu0 %732
    %734 = vrot.lane.b32.xlu0 %v669, 1
    %v735 = vpop.permute.xlu0 %734
    %736 = vrot.lane.b32.xlu0 %v670, 1
    %v737 = vpop.permute.xlu0 %736
    %738 = vrot.lane.b32.xlu0 %v671, 1
    %v739 = vpop.permute.xlu0 %738
    %v740 = vsel %vm261, %v737, %v739
    %v741 = vsel %vm261, %v735, %v737
    %v742 = vsel %vm261, %v733, %v735
    %v743 = vsel %vm261, %v739, %v733
    %v744 = vmul.f32 %v743, %v269
    %v745 = vmul.f32 %v742, %v273
    %v746 = vmul.f32 %v741, %v277
    %v747 = vmul.f32 %v740, %v281
    %748 = vst [vmem:[#allocation2 + $0x60] sm:$0xff] %v744
    %749 = vst [vmem:[#allocation2 + $0x68] sm:$0xff] %v745
    %750 = vst [vmem:[#allocation2 + $0x70] sm:$0xff] %v746
    %751 = vst [vmem:[#allocation2 + $0x78] sm:$0xff] %v747
    %752 = vst [vmem:[#allocation2 + $0x80] sm:$0xff] %v668
    %753 = vst [vmem:[#allocation2 + $0x88] sm:$0xff] %v669
    %754 = vst [vmem:[#allocation2 + $0x90] sm:$0xff] %v670
    %755 = vst [vmem:[#allocation2 + $0x98] sm:$0xff] %v671
    %756 = vrot.lane.b32.xlu0 %v668, 127
    %v757 = vpop.permute.xlu0 %756
    %758 = vrot.lane.b32.xlu0 %v669, 127
    %v759 = vpop.permute.xlu0 %758
    %760 = vrot.lane.b32.xlu0 %v670, 127
    %v761 = vpop.permute.xlu0 %760
    %762 = vrot.lane.b32.xlu0 %v671, 127
    %v763 = vpop.permute.xlu0 %762
    %v764 = vsel %vm314, %v761, %v763
    %v765 = vsel %vm314, %v759, %v761
    %v766 = vsel %vm314, %v757, %v759
    %v767 = vsel %vm314, %v763, %v757
    %v768 = vmul.f32 %v766, %v322
    %v769 = vmul.f32 %v765, %v326
    %v770 = vmul.f32 %v764, %v330
    %v771 = vmul.f32 %v767, %v334
    %772 = vst [vmem:[#allocation2 + $0xa0] sm:$0xff] %v768
    %773 = vst [vmem:[#allocation2 + $0xa8] sm:$0xff] %v769
    %774 = vst [vmem:[#allocation2 + $0xb0] sm:$0xff] %v770
    %775 = vst [vmem:[#allocation2 + $0xb8] sm:$0xff] %v771
    %776 = vrot.lane.b32.xlu0 %v668, 113
    %v777 = vpop.permute.xlu0 %776
    %778 = vrot.lane.b32.xlu0 %v669, 113
    %v779 = vpop.permute.xlu0 %778
    %780 = vrot.lane.b32.xlu0 %v670, 113
    %v781 = vpop.permute.xlu0 %780
    %782 = vrot.lane.b32.xlu0 %v671, 113
    %v783 = vpop.permute.xlu0 %782
    %v784 = vsel %vm363, %v781, %v783
    %v785 = vsel %vm363, %v779, %v781
    %v786 = vsel %vm363, %v777, %v779
    %v787 = vsel %vm363, %v783, %v777
    %v788 = vmul.f32 %v786, %v371
    %v789 = vmul.f32 %v785, %v375
    %v790 = vmul.f32 %v784, %v379
    %v791 = vmul.f32 %v787, %v383
    %792 = vst [vmem:[#allocation2 + $0xc0] sm:$0xff] %v788
    %793 = vst [vmem:[#allocation2 + $0xc8] sm:$0xff] %v789
    %794 = vst [vmem:[#allocation2 + $0xd0] sm:$0xff] %v790
    %795 = vst [vmem:[#allocation2 + $0xd8] sm:$0xff] %v791
    %796 = vrot.lane.b32.xlu0 %v668, 112
    %v797 = vpop.permute.xlu0 %796
    %798 = vrot.lane.b32.xlu0 %v669, 112
    %v799 = vpop.permute.xlu0 %798
    %800 = vrot.lane.b32.xlu0 %v670, 112
    %v801 = vpop.permute.xlu0 %800
    %802 = vrot.lane.b32.xlu0 %v671, 112
    %v803 = vpop.permute.xlu0 %802
    %v804 = vsel %vm400, %v801, %v803
    %v805 = vsel %vm400, %v799, %v801
    %v806 = vsel %vm400, %v797, %v799
    %v807 = vsel %vm400, %v803, %v797
    %v808 = vmul.f32 %v806, %v408
    %v809 = vmul.f32 %v805, %v412
    %v810 = vmul.f32 %v804, %v416
    %v811 = vmul.f32 %v807, %v420
    %812 = vst [vmem:[#allocation2 + $0xe0] sm:$0xff] %v808
    %813 = vst [vmem:[#allocation2 + $0xe8] sm:$0xff] %v809
    %814 = vst [vmem:[#allocation2 + $0xf0] sm:$0xff] %v810
    %815 = vst [vmem:[#allocation2 + $0xf8] sm:$0xff] %v811
    %816 = vrot.lane.b32.xlu0 %v668, 111
    %v817 = vpop.permute.xlu0 %816
    %818 = vrot.lane.b32.xlu0 %v669, 111
    %v819 = vpop.permute.xlu0 %818
    %820 = vrot.lane.b32.xlu0 %v670, 111
    %v821 = vpop.permute.xlu0 %820
    %822 = vrot.lane.b32.xlu0 %v671, 111
    %v823 = vpop.permute.xlu0 %822
    %v824 = vsel %vm449, %v821, %v823
    %v825 = vsel %vm449, %v819, %v821
    %v826 = vsel %vm449, %v817, %v819
    %v827 = vsel %vm449, %v823, %v817
    %v828 = vmul.f32 %v826, %v457
    %v829 = vmul.f32 %v825, %v461
    %v830 = vmul.f32 %v824, %v465
    %v831 = vmul.f32 %v827, %v469
    %832 = vst [vmem:[#allocation2 + $0x100] sm:$0xff] %v828
    %833 = vst [vmem:[#allocation2 + $0x108] sm:$0xff] %v829
    %834 = vst [vmem:[#allocation2 + $0x110] sm:$0xff] %v830
    %835 = vst [vmem:[#allocation2 + $0x118] sm:$0xff] %v831
    %v836 = vld [vmem:[#allocation11] sm:$0xff]
    %v837 = vld [vmem:[#allocation2] sm:$0xff]
    %v838 = vld [vmem:[#allocation2 + $0x8] sm:$0xff]
    %v839 = vld [vmem:[#allocation2 + $0x10] sm:$0xff]
    %v840 = vld [vmem:[#allocation2 + $0x18] sm:$0xff]
    %v841 = vld [vmem:[#allocation2 + $0x20] sm:$0xff]
    %v842 = vld [vmem:[#allocation2 + $0x28] sm:$0xff]
    %v843 = vld [vmem:[#allocation2 + $0x30] sm:$0xff]
    %v844 = vld [vmem:[#allocation2 + $0x38] sm:$0xff]
    %v845 = vld [vmem:[#allocation2 + $0x40] sm:$0xff]
    %v846 = vld [vmem:[#allocation2 + $0x48] sm:$0xff]
    %v847 = vld [vmem:[#allocation2 + $0x50] sm:$0xff]
    %v848 = vld [vmem:[#allocation2 + $0x58] sm:$0xff]
    %v849 = vld [vmem:[#allocation2 + $0x60] sm:$0xff]
    %v850 = vld [vmem:[#allocation2 + $0x68] sm:$0xff]
    %v851 = vld [vmem:[#allocation2 + $0x70] sm:$0xff]
    %v852 = vld [vmem:[#allocation2 + $0x78] sm:$0xff]
    %v853 = vld [vmem:[#allocation2 + $0x80] sm:$0xff]
    %v854 = vld [vmem:[#allocation2 + $0x88] sm:$0xff]
    %v855 = vld [vmem:[#allocation2 + $0x90] sm:$0xff]
    %v856 = vld [vmem:[#allocation2 + $0x98] sm:$0xff]
    %v857 = vld [vmem:[#allocation2 + $0xa0] sm:$0xff]
    %v858 = vld [vmem:[#allocation2 + $0xa8] sm:$0xff]
    %v859 = vld [vmem:[#allocation2 + $0xb0] sm:$0xff]
    %v860 = vld [vmem:[#allocation2 + $0xb8] sm:$0xff]
    %v861 = vld [vmem:[#allocation2 + $0xc0] sm:$0xff]
    %v862 = vld [vmem:[#allocation2 + $0xc8] sm:$0xff]
    %v863 = vld [vmem:[#allocation2 + $0xd0] sm:$0xff]
    %v864 = vld [vmem:[#allocation2 + $0xd8] sm:$0xff]
    %v865 = vld [vmem:[#allocation2 + $0xe0] sm:$0xff]
    %v866 = vld [vmem:[#allocation2 + $0xe8] sm:$0xff]
    %v867 = vld [vmem:[#allocation2 + $0xf0] sm:$0xff]
    %v868 = vld [vmem:[#allocation2 + $0xf8] sm:$0xff]
    %v869 = vld [vmem:[#allocation2 + $0x100] sm:$0xff]
    %v870 = vld [vmem:[#allocation2 + $0x108] sm:$0xff]
    %v871 = vld [vmem:[#allocation2 + $0x110] sm:$0xff]
    %v872 = vld [vmem:[#allocation2 + $0x118] sm:$0xff]
    %v873 = vld [vmem:[#allocation12] sm:$0xff]
    %875 = vset.pattern.permute.xlu0 0
    %876 = vperm.xlu0 %875, %v873
    %v877 = vpop.permute.xlu0 %876
    %vm879 = vcmask 588800
    %v881 = vsel %vm879, %v836, 0
    %883 = vmatprep.subr.mxu0 %v838
    %884 = vmatpush1.msra.mxu0 %v837
    %885 = vmatprep.subr.mxu0 %v842
    %886 = vmatpush1.msra.mxu0 %v841
    %887 = vmatprep.subr.mxu0 %v846
    %888 = vmatpush1.msra.mxu0 %v845
    %889 = vmatprep.subr.mxu0 %v850
    %890 = vmatpush1.msra.mxu0 %v849
    %891 = vmatprep.subr.mxu0 %v854
    %892 = vmatpush1.msra.mxu0 %v853
    %893 = vmatprep.subr.mxu0 %v858
    %894 = vmatpush1.msra.mxu0 %v857
    %895 = vmatprep.subr.mxu0 %v862
    %896 = vmatpush1.msra.mxu0 %v861
    %897 = vmatprep.subr.mxu0 %v866
    %898 = vmatpush1.msra.mxu0 %v865
    %899 = vmatprep.subr.mxu0 %v870
    %900 = vmatpush1.msra.mxu0 %v869
    %901 = vmatprep.subr.mxu0 0.0
    %902 = vmatpush1.msra.mxu0 0.0
    %903 = vmatprep.subr.mxu0 0.0
    %904 = vmatpush1.msra.mxu0 0.0
    %905 = vmatprep.subr.mxu0 0.0
    %906 = vmatpush1.msra.mxu0 0.0
    %907 = vmatprep.subr.mxu0 0.0
    %908 = vmatpush1.msra.mxu0 0.0
    %909 = vmatprep.subr.mxu0 0.0
    %910 = vmatpush1.msra.mxu0 0.0
    %911 = vmatprep.subr.mxu0 0.0
    %912 = vmatpush1.msra.mxu0 0.0
    %913 = vmatprep.subr.mxu0 0.0
    %914 = vmatpush1.msra.mxu0 0.0
    %915 = vmatprep.subr.mxu0 0.0
    %916 = vmatpush1.msra.mxu0 0.0
    %917 = vmatprep.subr.mxu0 0.0
    %918 = vmatpush1.msra.mxu0 0.0
    %919 = vmatprep.subr.mxu0 0.0
    %920 = vmatpush1.msra.mxu0 0.0
    %921 = vmatprep.subr.mxu0 0.0
    %922 = vmatpush1.msra.mxu0 0.0
    %923 = vmatprep.subr.mxu0 0.0
    %924 = vmatpush1.msra.mxu0 0.0
    %925 = vmatprep.subr.mxu0 0.0
    %926 = vmatpush1.msra.mxu0 0.0
    %927 = vmatprep.subr.mxu0 0.0
    %928 = vmatpush1.msra.mxu0 0.0
    %929 = vmatprep.subr.mxu0 0.0
    %930 = vmatpush1.msra.mxu0 0.0
    %931 = vmatprep.subr.mxu0 0.0
    %932 = vmatpush1.msra.mxu0 0.0
    %933 = vmatprep.subr.mxu0 0.0
    %934 = vmatpush1.msra.mxu0 0.0
    %935 = vmatprep.subr.mxu0 0.0
    %936 = vmatpush1.msra.mxu0 0.0
    %937 = vmatprep.subr.mxu0 0.0
    %938 = vmatpush1.msra.mxu0 0.0
    %939 = vmatprep.subr.mxu0 0.0
    %940 = vmatpush1.msra.mxu0 0.0
    %941 = vmatprep.subr.mxu0 0.0
    %942 = vmatpush1.msra.mxu0 0.0
    %943 = vmatprep.subr.mxu0 0.0
    %944 = vmatpush1.msra.mxu0 0.0
    %945 = vmatprep.subr.mxu0 0.0
    %946 = vmatpush1.msra.mxu0 0.0
    %947 = vmatprep.mubr.f32.mxu0 0.0
    %948 = vmatmul.mubr.f32.gmra.mrb[0].mxu0 %v881
    %v949 = vpop.f32.mrb[0].mxu0
    %v950 = vadd.f32 %v877, %v949
    %v951 = vpop.f32.mrb[0].mxu0
    %v952 = vadd.f32 %v877, %v951
    %953 = vdwg.mxu0
    %954 = vmatprep.subr.mxu0 %v840
    %955 = vmatpush1.msra.mxu0 %v839
    %956 = vmatprep.subr.mxu0 %v844
    %957 = vmatpush1.msra.mxu0 %v843
    %958 = vmatprep.subr.mxu0 %v848
    %959 = vmatpush1.msra.mxu0 %v847
    %960 = vmatprep.subr.mxu0 %v852
    %961 = vmatpush1.msra.mxu0 %v851
    %962 = vmatprep.subr.mxu0 %v856
    %963 = vmatpush1.msra.mxu0 %v855
    %964 = vmatprep.subr.mxu0 %v860
    %965 = vmatpush1.msra.mxu0 %v859
    %966 = vmatprep.subr.mxu0 %v864
    %967 = vmatpush1.msra.mxu0 %v863
    %968 = vmatprep.subr.mxu0 %v868
    %969 = vmatpush1.msra.mxu0 %v867
    %970 = vmatprep.subr.mxu0 %v872
    %971 = vmatpush1.msra.mxu0 %v871
    %972 = vmatprep.subr.mxu0 0.0
    %973 = vmatpush1.msra.mxu0 0.0
    %974 = vmatprep.subr.mxu0 0.0
    %975 = vmatpush1.msra.mxu0 0.0
    %976 = vmatprep.subr.mxu0 0.0
    %977 = vmatpush1.msra.mxu0 0.0
    %978 = vmatprep.subr.mxu0 0.0
    %979 = vmatpush1.msra.mxu0 0.0
    %980 = vmatprep.subr.mxu0 0.0
    %981 = vmatpush1.msra.mxu0 0.0
    %982 = vmatprep.subr.mxu0 0.0
    %983 = vmatpush1.msra.mxu0 0.0
    %984 = vmatprep.subr.mxu0 0.0
    %985 = vmatpush1.msra.mxu0 0.0
    %986 = vmatprep.subr.mxu0 0.0
    %987 = vmatpush1.msra.mxu0 0.0
    %988 = vmatprep.subr.mxu0 0.0
    %989 = vmatpush1.msra.mxu0 0.0
    %990 = vmatprep.subr.mxu0 0.0
    %991 = vmatpush1.msra.mxu0 0.0
    %992 = vmatprep.subr.mxu0 0.0
    %993 = vmatpush1.msra.mxu0 0.0
    %994 = vmatprep.subr.mxu0 0.0
    %995 = vmatpush1.msra.mxu0 0.0
    %996 = vmatprep.subr.mxu0 0.0
    %997 = vmatpush1.msra.mxu0 0.0
    %998 = vmatprep.subr.mxu0 0.0
    %999 = vmatpush1.msra.mxu0 0.0
    %1000 = vmatprep.subr.mxu0 0.0
    %1001 = vmatpush1.msra.mxu0 0.0
    %1002 = vmatprep.subr.mxu0 0.0
    %1003 = vmatpush1.msra.mxu0 0.0
    %1004 = vmatprep.subr.mxu0 0.0
    %1005 = vmatpush1.msra.mxu0 0.0
    %1006 = vmatprep.subr.mxu0 0.0
    %1007 = vmatpush1.msra.mxu0 0.0
    %1008 = vmatprep.subr.mxu0 0.0
    %1009 = vmatpush1.msra.mxu0 0.0
    %1010 = vmatprep.subr.mxu0 0.0
    %1011 = vmatpush1.msra.mxu0 0.0
    %1012 = vmatprep.subr.mxu0 0.0
    %1013 = vmatpush1.msra.mxu0 0.0
    %1014 = vmatprep.subr.mxu0 0.0
    %1015 = vmatpush1.msra.mxu0 0.0
    %1016 = vmatprep.subr.mxu0 0.0
    %1017 = vmatpush1.msra.mxu0 0.0
    %1018 = vmatprep.mubr.f32.mxu0 0.0
    %1019 = vmatmul.mubr.f32.gmra.mrb[0].mxu0 %v881
    %v1020 = vpop.f32.mrb[0].mxu0
    %v1021 = vadd.f32 %v877, %v1020
    %v1022 = vpop.f32.mrb[0].mxu0
    %v1023 = vadd.f32 %v877, %v1022
    %1024 = vdwg.mxu0
    %v1025 = vmul.f32 %v950, 0.1
    %v1026 = vmul.f32 %v952, 0.1
    %v1027 = vmul.f32 %v1021, 0.1
    %v1028 = vmul.f32 %v1023, 0.1
    %v1029 = vmax.f32 %v950, %v1025
    %v1030 = vmax.f32 %v952, %v1026
    %v1031 = vmax.f32 %v1021, %v1027
    %v1032 = vmax.f32 %v1023, %v1028
    %1033 = vrot.lane.b32.xlu0 %v1029, 127
    %v1034 = vpop.permute.xlu0 %1033
    %1035 = vrot.lane.b32.xlu0 %v1030, 127
    %v1036 = vpop.permute.xlu0 %1035
    %1037 = vrot.lane.b32.xlu0 %v1031, 127
    %v1038 = vpop.permute.xlu0 %1037
    %1039 = vrot.lane.b32.xlu0 %v1032, 127
    %v1040 = vpop.permute.xlu0 %1039
    %v1041 = vsel %vm314, %v1038, %v1040
    %v1042 = vsel %vm314, %v1036, %v1038
    %v1043 = vsel %vm314, %v1034, %v1036
    %v1044 = vsel %vm314, %v1040, %v1034
    %v1045 = vmax.f32 %v1029, %v1043
    %v1046 = vmax.f32 %v1030, %v1042
    %v1047 = vmax.f32 %v1031, %v1041
    %v1048 = vmax.f32 %v1032, %v1044
    %1049 = vrot.lane.b32.xlu0 %v1045, 112
    %v1050 = vpop.permute.xlu0 %1049
    %1051 = vrot.lane.b32.xlu0 %v1046, 112
    %v1052 = vpop.permute.xlu0 %1051
    %1053 = vrot.lane.b32.xlu0 %v1047, 112
    %v1054 = vpop.permute.xlu0 %1053
    %1055 = vrot.lane.b32.xlu0 %v1048, 112
    %v1056 = vpop.permute.xlu0 %1055
    %v1057 = vsel %vm400, %v1054, %v1056
    %v1058 = vsel %vm400, %v1052, %v1054
    %v1059 = vsel %vm400, %v1050, %v1052
    %v1060 = vsel %vm400, %v1056, %v1050
    %v1061 = vmax.f32 %v1045, %v1059
    %v1062 = vmax.f32 %v1046, %v1058
    %v1063 = vmax.f32 %v1047, %v1057
    %v1064 = vmax.f32 %v1048, %v1060
    %v1065 = vld [vmem:[#allocation14] sm:$0xff]
    %v1066 = vld [vmem:[#allocation14 + $0x8] sm:$0xff]
    %vm1067 = vcmask 130048
    %v1069 = vsel %vm1067, %v1061, 0
    %1071 = vmatprep.subr.mxu0 0.0
    %1072 = vmatpush1.msra.mxu0 %v1065
    %1073 = vmatprep.subr.mxu0 0.0
    %1074 = vmatpush1.msra.mxu0 %v1066
    %1075 = vmatprep.subr.mxu0 0.0
    %1076 = vmatpush1.msra.mxu0 0.0
    %1077 = vmatprep.subr.mxu0 0.0
    %1078 = vmatpush1.msra.mxu0 0.0
    %1079 = vmatprep.subr.mxu0 0.0
    %1080 = vmatpush1.msra.mxu0 0.0
    %1081 = vmatprep.subr.mxu0 0.0
    %1082 = vmatpush1.msra.mxu0 0.0
    %1083 = vmatprep.subr.mxu0 0.0
    %1084 = vmatpush1.msra.mxu0 0.0
    %1085 = vmatprep.subr.mxu0 0.0
    %1086 = vmatpush1.msra.mxu0 0.0
    %1087 = vmatprep.subr.mxu0 0.0
    %1088 = vmatpush1.msra.mxu0 0.0
    %1089 = vmatprep.subr.mxu0 0.0
    %1090 = vmatpush1.msra.mxu0 0.0
    %1091 = vmatprep.subr.mxu0 0.0
    %1092 = vmatpush1.msra.mxu0 0.0
    %1093 = vmatprep.subr.mxu0 0.0
    %1094 = vmatpush1.msra.mxu0 0.0
    %1095 = vmatprep.subr.mxu0 0.0
    %1096 = vmatpush1.msra.mxu0 0.0
    %1097 = vmatprep.subr.mxu0 0.0
    %1098 = vmatpush1.msra.mxu0 0.0
    %1099 = vmatprep.subr.mxu0 0.0
    %1100 = vmatpush1.msra.mxu0 0.0
    %1101 = vmatprep.subr.mxu0 0.0
    %1102 = vmatpush1.msra.mxu0 0.0
    %1103 = vmatprep.subr.mxu0 0.0
    %1104 = vmatpush1.msra.mxu0 0.0
    %1105 = vmatprep.subr.mxu0 0.0
    %1106 = vmatpush1.msra.mxu0 0.0
    %1107 = vmatprep.subr.mxu0 0.0
    %1108 = vmatpush1.msra.mxu0 0.0
    %1109 = vmatprep.subr.mxu0 0.0
    %1110 = vmatpush1.msra.mxu0 0.0
    %1111 = vmatprep.subr.mxu0 0.0
    %1112 = vmatpush1.msra.mxu0 0.0
    %1113 = vmatprep.subr.mxu0 0.0
    %1114 = vmatpush1.msra.mxu0 0.0
    %1115 = vmatprep.subr.mxu0 0.0
    %1116 = vmatpush1.msra.mxu0 0.0
    %1117 = vmatprep.subr.mxu0 0.0
    %1118 = vmatpush1.msra.mxu0 0.0
    %1119 = vmatprep.subr.mxu0 0.0
    %1120 = vmatpush1.msra.mxu0 0.0
    %1121 = vmatprep.subr.mxu0 0.0
    %1122 = vmatpush1.msra.mxu0 0.0
    %1123 = vmatprep.subr.mxu0 0.0
    %1124 = vmatpush1.msra.mxu0 0.0
    %1125 = vmatprep.subr.mxu0 0.0
    %1126 = vmatpush1.msra.mxu0 0.0
    %1127 = vmatprep.subr.mxu0 0.0
    %1128 = vmatpush1.msra.mxu0 0.0
    %1129 = vmatprep.subr.mxu0 0.0
    %1130 = vmatpush1.msra.mxu0 0.0
    %1131 = vmatprep.subr.mxu0 0.0
    %1132 = vmatpush1.msra.mxu0 0.0
    %1133 = vmatprep.subr.mxu0 0.0
    %1134 = vmatpush1.msra.mxu0 0.0
    %1135 = vmatprep.mubr.f32.mxu0 0.0
    %1136 = vmatmul.mubr.f32.gmra.mrb[0].mxu0 %v1069
    %v1137 = vpop.f32.mrb[0].mxu0
    %v1138 = vadd.f32 0.0, %v1137
    %v1139 = vpop.f32.mrb[0].mxu0
    %1140 = vdwg.mxu0
    %vm1141 = vcmask 64512
    %1142 = vst.msk [vmem:[#allocation15] sm:$0xff] %vm1141, %v1138
    %1143 = vrot.lane.b32.xlu0 %v1061, 96
    %v1144 = vpop.permute.xlu0 %1143
    %v1145 = vsel %vm1067, %v1144, 0
    %1147 = vmatprep.subr.mxu0 0.0
    %1148 = vmatpush1.msra.mxu0 %v1065
    %1149 = vmatprep.subr.mxu0 0.0
    %1150 = vmatpush1.msra.mxu0 %v1066
    %1151 = vmatprep.subr.mxu0 0.0
    %1152 = vmatpush1.msra.mxu0 0.0
    %1153 = vmatprep.subr.mxu0 0.0
    %1154 = vmatpush1.msra.mxu0 0.0
    %1155 = vmatprep.subr.mxu0 0.0
    %1156 = vmatpush1.msra.mxu0 0.0
    %1157 = vmatprep.subr.mxu0 0.0
    %1158 = vmatpush1.msra.mxu0 0.0
    %1159 = vmatprep.subr.mxu0 0.0
    %1160 = vmatpush1.msra.mxu0 0.0
    %1161 = vmatprep.subr.mxu0 0.0
    %1162 = vmatpush1.msra.mxu0 0.0
    %1163 = vmatprep.subr.mxu0 0.0
    %1164 = vmatpush1.msra.mxu0 0.0
    %1165 = vmatprep.subr.mxu0 0.0
    %1166 = vmatpush1.msra.mxu0 0.0
    %1167 = vmatprep.subr.mxu0 0.0
    %1168 = vmatpush1.msra.mxu0 0.0
    %1169 = vmatprep.subr.mxu0 0.0
    %1170 = vmatpush1.msra.mxu0 0.0
    %1171 = vmatprep.subr.mxu0 0.0
    %1172 = vmatpush1.msra.mxu0 0.0
    %1173 = vmatprep.subr.mxu0 0.0
    %1174 = vmatpush1.msra.mxu0 0.0
    %1175 = vmatprep.subr.mxu0 0.0
    %1176 = vmatpush1.msra.mxu0 0.0
    %1177 = vmatprep.subr.mxu0 0.0
    %1178 = vmatpush1.msra.mxu0 0.0
    %1179 = vmatprep.subr.mxu0 0.0
    %1180 = vmatpush1.msra.mxu0 0.0
    %1181 = vmatprep.subr.mxu0 0.0
    %1182 = vmatpush1.msra.mxu0 0.0
    %1183 = vmatprep.subr.mxu0 0.0
    %1184 = vmatpush1.msra.mxu0 0.0
    %1185 = vmatprep.subr.mxu0 0.0
    %1186 = vmatpush1.msra.mxu0 0.0
    %1187 = vmatprep.subr.mxu0 0.0
    %1188 = vmatpush1.msra.mxu0 0.0
    %1189 = vmatprep.subr.mxu0 0.0
    %1190 = vmatpush1.msra.mxu0 0.0
    %1191 = vmatprep.subr.mxu0 0.0
    %1192 = vmatpush1.msra.mxu0 0.0
    %1193 = vmatprep.subr.mxu0 0.0
    %1194 = vmatpush1.msra.mxu0 0.0
    %1195 = vmatprep.subr.mxu0 0.0
    %1196 = vmatpush1.msra.mxu0 0.0
    %1197 = vmatprep.subr.mxu0 0.0
    %1198 = vmatpush1.msra.mxu0 0.0
    %1199 = vmatprep.subr.mxu0 0.0
    %1200 = vmatpush1.msra.mxu0 0.0
    %1201 = vmatprep.subr.mxu0 0.0
    %1202 = vmatpush1.msra.mxu0 0.0
    %1203 = vmatprep.subr.mxu0 0.0
    %1204 = vmatpush1.msra.mxu0 0.0
    %1205 = vmatprep.subr.mxu0 0.0
    %1206 = vmatpush1.msra.mxu0 0.0
    %1207 = vmatprep.subr.mxu0 0.0
    %1208 = vmatpush1.msra.mxu0 0.0
    %1209 = vmatprep.subr.mxu0 0.0
    %1210 = vmatpush1.msra.mxu0 0.0
    %1211 = vmatprep.mubr.f32.mxu0 0.0
    %1212 = vmatmul.mubr.f32.gmra.mrb[0].mxu0 %v1145
    %v1213 = vpop.f32.mrb[0].mxu0
    %v1214 = vadd.f32 0.0, %v1213
    %v1215 = vpop.f32.mrb[0].mxu0
    %1216 = vdwg.mxu0
    %1218 = vrot.lane.b32.xlu0 %v1214, 8
    %v1219 = vpop.permute.xlu0 %1218
    %vm1221 = vcmask 130112
    %1222 = vst.msk [vmem:[#allocation15] sm:$0xff] %vm1221, %v1219
    %1223 = vrot.lane.b32.xlu0 %v1061, 64
    %v1224 = vpop.permute.xlu0 %1223
    %v1225 = vsel %vm1067, %v1224, 0
    %1227 = vmatprep.subr.mxu0 0.0
    %1228 = vmatpush1.msra.mxu0 %v1065
    %1229 = vmatprep.subr.mxu0 0.0
    %1230 = vmatpush1.msra.mxu0 %v1066
    %1231 = vmatprep.subr.mxu0 0.0
    %1232 = vmatpush1.msra.mxu0 0.0
    %1233 = vmatprep.subr.mxu0 0.0
    %1234 = vmatpush1.msra.mxu0 0.0
    %1235 = vmatprep.subr.mxu0 0.0
    %1236 = vmatpush1.msra.mxu0 0.0
    %1237 = vmatprep.subr.mxu0 0.0
    %1238 = vmatpush1.msra.mxu0 0.0
    %1239 = vmatprep.subr.mxu0 0.0
    %1240 = vmatpush1.msra.mxu0 0.0
    %1241 = vmatprep.subr.mxu0 0.0
    %1242 = vmatpush1.msra.mxu0 0.0
    %1243 = vmatprep.subr.mxu0 0.0
    %1244 = vmatpush1.msra.mxu0 0.0
    %1245 = vmatprep.subr.mxu0 0.0
    %1246 = vmatpush1.msra.mxu0 0.0
    %1247 = vmatprep.subr.mxu0 0.0
    %1248 = vmatpush1.msra.mxu0 0.0
    %1249 = vmatprep.subr.mxu0 0.0
    %1250 = vmatpush1.msra.mxu0 0.0
    %1251 = vmatprep.subr.mxu0 0.0
    %1252 = vmatpush1.msra.mxu0 0.0
    %1253 = vmatprep.subr.mxu0 0.0
    %1254 = vmatpush1.msra.mxu0 0.0
    %1255 = vmatprep.subr.mxu0 0.0
    %1256 = vmatpush1.msra.mxu0 0.0
    %1257 = vmatprep.subr.mxu0 0.0
    %1258 = vmatpush1.msra.mxu0 0.0
    %1259 = vmatprep.subr.mxu0 0.0
    %1260 = vmatpush1.msra.mxu0 0.0
    %1261 = vmatprep.subr.mxu0 0.0
    %1262 = vmatpush1.msra.mxu0 0.0
    %1263 = vmatprep.subr.mxu0 0.0
    %1264 = vmatpush1.msra.mxu0 0.0
    %1265 = vmatprep.subr.mxu0 0.0
    %1266 = vmatpush1.msra.mxu0 0.0
    %1267 = vmatprep.subr.mxu0 0.0
    %1268 = vmatpush1.msra.mxu0 0.0
    %1269 = vmatprep.subr.mxu0 0.0
    %1270 = vmatpush1.msra.mxu0 0.0
    %1271 = vmatprep.subr.mxu0 0.0
    %1272 = vmatpush1.msra.mxu0 0.0
    %1273 = vmatprep.subr.mxu0 0.0
    %1274 = vmatpush1.msra.mxu0 0.0
    %1275 = vmatprep.subr.mxu0 0.0
    %1276 = vmatpush1.msra.mxu0 0.0
    %1277 = vmatprep.subr.mxu0 0.0
    %1278 = vmatpush1.msra.mxu0 0.0
    %1279 = vmatprep.subr.mxu0 0.0
    %1280 = vmatpush1.msra.mxu0 0.0
    %1281 = vmatprep.subr.mxu0 0.0
    %1282 = vmatpush1.msra.mxu0 0.0
    %1283 = vmatprep.subr.mxu0 0.0
    %1284 = vmatpush1.msra.mxu0 0.0
    %1285 = vmatprep.subr.mxu0 0.0
    %1286 = vmatpush1.msra.mxu0 0.0
    %1287 = vmatprep.subr.mxu0 0.0
    %1288 = vmatpush1.msra.mxu0 0.0
    %1289 = vmatprep.subr.mxu0 0.0
    %1290 = vmatpush1.msra.mxu0 0.0
    %1291 = vmatprep.mubr.f32.mxu0 0.0
    %1292 = vmatmul.mubr.f32.gmra.mrb[0].mxu0 %v1225
    %v1293 = vpop.f32.mrb[0].mxu0
    %v1294 = vadd.f32 0.0, %v1293
    %v1295 = vpop.f32.mrb[0].mxu0
    %1296 = vdwg.mxu0
    %1298 = vrot.lane.b32.xlu0 %v1294, 16
    %v1299 = vpop.permute.xlu0 %1298
    %vm1301 = vcmask 195712
    %1302 = vst.msk [vmem:[#allocation15] sm:$0xff] %vm1301, %v1299
    %1303 = vrot.lane.b32.xlu0 %v1061, 32
    %v1304 = vpop.permute.xlu0 %1303
    %v1305 = vsel %vm1067, %v1304, 0
    %1307 = vmatprep.subr.mxu0 0.0
    %1308 = vmatpush1.msra.mxu0 %v1065
    %1309 = vmatprep.subr.mxu0 0.0
    %1310 = vmatpush1.msra.mxu0 %v1066
    %1311 = vmatprep.subr.mxu0 0.0
    %1312 = vmatpush1.msra.mxu0 0.0
    %1313 = vmatprep.subr.mxu0 0.0
    %1314 = vmatpush1.msra.mxu0 0.0
    %1315 = vmatprep.subr.mxu0 0.0
    %1316 = vmatpush1.msra.mxu0 0.0
    %1317 = vmatprep.subr.mxu0 0.0
    %1318 = vmatpush1.msra.mxu0 0.0
    %1319 = vmatprep.subr.mxu0 0.0
    %1320 = vmatpush1.msra.mxu0 0.0
    %1321 = vmatprep.subr.mxu0 0.0
    %1322 = vmatpush1.msra.mxu0 0.0
    %1323 = vmatprep.subr.mxu0 0.0
    %1324 = vmatpush1.msra.mxu0 0.0
    %1325 = vmatprep.subr.mxu0 0.0
    %1326 = vmatpush1.msra.mxu0 0.0
    %1327 = vmatprep.subr.mxu0 0.0
    %1328 = vmatpush1.msra.mxu0 0.0
    %1329 = vmatprep.subr.mxu0 0.0
    %1330 = vmatpush1.msra.mxu0 0.0
    %1331 = vmatprep.subr.mxu0 0.0
    %1332 = vmatpush1.msra.mxu0 0.0
    %1333 = vmatprep.subr.mxu0 0.0
    %1334 = vmatpush1.msra.mxu0 0.0
    %1335 = vmatprep.subr.mxu0 0.0
    %1336 = vmatpush1.msra.mxu0 0.0
    %1337 = vmatprep.subr.mxu0 0.0
    %1338 = vmatpush1.msra.mxu0 0.0
    %1339 = vmatprep.subr.mxu0 0.0
    %1340 = vmatpush1.msra.mxu0 0.0
    %1341 = vmatprep.subr.mxu0 0.0
    %1342 = vmatpush1.msra.mxu0 0.0
    %1343 = vmatprep.subr.mxu0 0.0
    %1344 = vmatpush1.msra.mxu0 0.0
    %1345 = vmatprep.subr.mxu0 0.0
    %1346 = vmatpush1.msra.mxu0 0.0
    %1347 = vmatprep.subr.mxu0 0.0
    %1348 = vmatpush1.msra.mxu0 0.0
    %1349 = vmatprep.subr.mxu0 0.0
    %1350 = vmatpush1.msra.mxu0 0.0
    %1351 = vmatprep.subr.mxu0 0.0
    %1352 = vmatpush1.msra.mxu0 0.0
    %1353 = vmatprep.subr.mxu0 0.0
    %1354 = vmatpush1.msra.mxu0 0.0
    %1355 = vmatprep.subr.mxu0 0.0
    %1356 = vmatpush1.msra.mxu0 0.0
    %1357 = vmatprep.subr.mxu0 0.0
    %1358 = vmatpush1.msra.mxu0 0.0
    %1359 = vmatprep.subr.mxu0 0.0
    %1360 = vmatpush1.msra.mxu0 0.0
    %1361 = vmatprep.subr.mxu0 0.0
    %1362 = vmatpush1.msra.mxu0 0.0
    %1363 = vmatprep.subr.mxu0 0.0
    %1364 = vmatpush1.msra.mxu0 0.0
    %1365 = vmatprep.subr.mxu0 0.0
    %1366 = vmatpush1.msra.mxu0 0.0
    %1367 = vmatprep.subr.mxu0 0.0
    %1368 = vmatpush1.msra.mxu0 0.0
    %1369 = vmatprep.subr.mxu0 0.0
    %1370 = vmatpush1.msra.mxu0 0.0
    %1371 = vmatprep.mubr.f32.mxu0 0.0
    %1372 = vmatmul.mubr.f32.gmra.mrb[0].mxu0 %v1305
    %v1373 = vpop.f32.mrb[0].mxu0
    %v1374 = vadd.f32 0.0, %v1373
    %v1375 = vpop.f32.mrb[0].mxu0
    %1376 = vdwg.mxu0
    %1378 = vrot.lane.b32.xlu0 %v1374, 24
    %v1379 = vpop.permute.xlu0 %1378
    %vm1381 = vcmask 261312
    %1382 = vst.msk [vmem:[#allocation15] sm:$0xff] %vm1381, %v1379
    %v1384 = vsel %vm1067, %v1062, 0
    %1386 = vmatprep.subr.mxu0 0.0
    %1387 = vmatpush1.msra.mxu0 %v1065
    %1388 = vmatprep.subr.mxu0 0.0
    %1389 = vmatpush1.msra.mxu0 %v1066
    %1390 = vmatprep.subr.mxu0 0.0
    %1391 = vmatpush1.msra.mxu0 0.0
    %1392 = vmatprep.subr.mxu0 0.0
    %1393 = vmatpush1.msra.mxu0 0.0
    %1394 = vmatprep.subr.mxu0 0.0
    %1395 = vmatpush1.msra.mxu0 0.0
    %1396 = vmatprep.subr.mxu0 0.0
    %1397 = vmatpush1.msra.mxu0 0.0
    %1398 = vmatprep.subr.mxu0 0.0
    %1399 = vmatpush1.msra.mxu0 0.0
    %1400 = vmatprep.subr.mxu0 0.0
    %1401 = vmatpush1.msra.mxu0 0.0
    %1402 = vmatprep.subr.mxu0 0.0
    %1403 = vmatpush1.msra.mxu0 0.0
    %1404 = vmatprep.subr.mxu0 0.0
    %1405 = vmatpush1.msra.mxu0 0.0
    %1406 = vmatprep.subr.mxu0 0.0
    %1407 = vmatpush1.msra.mxu0 0.0
    %1408 = vmatprep.subr.mxu0 0.0
    %1409 = vmatpush1.msra.mxu0 0.0
    %1410 = vmatprep.subr.mxu0 0.0
    %1411 = vmatpush1.msra.mxu0 0.0
    %1412 = vmatprep.subr.mxu0 0.0
    %1413 = vmatpush1.msra.mxu0 0.0
    %1414 = vmatprep.subr.mxu0 0.0
    %1415 = vmatpush1.msra.mxu0 0.0
    %1416 = vmatprep.subr.mxu0 0.0
    %1417 = vmatpush1.msra.mxu0 0.0
    %1418 = vmatprep.subr.mxu0 0.0
    %1419 = vmatpush1.msra.mxu0 0.0
    %1420 = vmatprep.subr.mxu0 0.0
    %1421 = vmatpush1.msra.mxu0 0.0
    %1422 = vmatprep.subr.mxu0 0.0
    %1423 = vmatpush1.msra.mxu0 0.0
    %1424 = vmatprep.subr.mxu0 0.0
    %1425 = vmatpush1.msra.mxu0 0.0
    %1426 = vmatprep.subr.mxu0 0.0
    %1427 = vmatpush1.msra.mxu0 0.0
    %1428 = vmatprep.subr.mxu0 0.0
    %1429 = vmatpush1.msra.mxu0 0.0
    %1430 = vmatprep.subr.mxu0 0.0
    %1431 = vmatpush1.msra.mxu0 0.0
    %1432 = vmatprep.subr.mxu0 0.0
    %1433 = vmatpush1.msra.mxu0 0.0
    %1434 = vmatprep.subr.mxu0 0.0
    %1435 = vmatpush1.msra.mxu0 0.0
    %1436 = vmatprep.subr.mxu0 0.0
    %1437 = vmatpush1.msra.mxu0 0.0
    %1438 = vmatprep.subr.mxu0 0.0
    %1439 = vmatpush1.msra.mxu0 0.0
    %1440 = vmatprep.subr.mxu0 0.0
    %1441 = vmatpush1.msra.mxu0 0.0
    %1442 = vmatprep.subr.mxu0 0.0
    %1443 = vmatpush1.msra.mxu0 0.0
    %1444 = vmatprep.subr.mxu0 0.0
    %1445 = vmatpush1.msra.mxu0 0.0
    %1446 = vmatprep.subr.mxu0 0.0
    %1447 = vmatpush1.msra.mxu0 0.0
    %1448 = vmatprep.subr.mxu0 0.0
    %1449 = vmatpush1.msra.mxu0 0.0
    %1450 = vmatprep.mubr.f32.mxu0 0.0
    %1451 = vmatmul.mubr.f32.gmra.mrb[0].mxu0 %v1384
    %v1452 = vpop.f32.mrb[0].mxu0
    %v1453 = vadd.f32 0.0, %v1452
    %v1454 = vpop.f32.mrb[0].mxu0
    %1455 = vdwg.mxu0
    %1457 = vrot.lane.b32.xlu0 %v1453, 32
    %v1458 = vpop.permute.xlu0 %1457
    %vm1460 = vcmask 326912
    %1461 = vst.msk [vmem:[#allocation15] sm:$0xff] %vm1460, %v1458
    %1462 = vrot.lane.b32.xlu0 %v1062, 96
    %v1463 = vpop.permute.xlu0 %1462
    %v1464 = vsel %vm1067, %v1463, 0
    %1466 = vmatprep.subr.mxu0 0.0
    %1467 = vmatpush1.msra.mxu0 %v1065
    %1468 = vmatprep.subr.mxu0 0.0
    %1469 = vmatpush1.msra.mxu0 %v1066
    %1470 = vmatprep.subr.mxu0 0.0
    %1471 = vmatpush1.msra.mxu0 0.0
    %1472 = vmatprep.subr.mxu0 0.0
    %1473 = vmatpush1.msra.mxu0 0.0
    %1474 = vmatprep.subr.mxu0 0.0
    %1475 = vmatpush1.msra.mxu0 0.0
    %1476 = vmatprep.subr.mxu0 0.0
    %1477 = vmatpush1.msra.mxu0 0.0
    %1478 = vmatprep.subr.mxu0 0.0
    %1479 = vmatpush1.msra.mxu0 0.0
    %1480 = vmatprep.subr.mxu0 0.0
    %1481 = vmatpush1.msra.mxu0 0.0
    %1482 = vmatprep.subr.mxu0 0.0
    %1483 = vmatpush1.msra.mxu0 0.0
    %1484 = vmatprep.subr.mxu0 0.0
    %1485 = vmatpush1.msra.mxu0 0.0
    %1486 = vmatprep.subr.mxu0 0.0
    %1487 = vmatpush1.msra.mxu0 0.0
    %1488 = vmatprep.subr.mxu0 0.0
    %1489 = vmatpush1.msra.mxu0 0.0
    %1490 = vmatprep.subr.mxu0 0.0
    %1491 = vmatpush1.msra.mxu0 0.0
    %1492 = vmatprep.subr.mxu0 0.0
    %1493 = vmatpush1.msra.mxu0 0.0
    %1494 = vmatprep.subr.mxu0 0.0
    %1495 = vmatpush1.msra.mxu0 0.0
    %1496 = vmatprep.subr.mxu0 0.0
    %1497 = vmatpush1.msra.mxu0 0.0
    %1498 = vmatprep.subr.mxu0 0.0
    %1499 = vmatpush1.msra.mxu0 0.0
    %1500 = vmatprep.subr.mxu0 0.0
    %1501 = vmatpush1.msra.mxu0 0.0
    %1502 = vmatprep.subr.mxu0 0.0
    %1503 = vmatpush1.msra.mxu0 0.0
    %1504 = vmatprep.subr.mxu0 0.0
    %1505 = vmatpush1.msra.mxu0 0.0
    %1506 = vmatprep.subr.mxu0 0.0
    %1507 = vmatpush1.msra.mxu0 0.0
    %1508 = vmatprep.subr.mxu0 0.0
    %1509 = vmatpush1.msra.mxu0 0.0
    %1510 = vmatprep.subr.mxu0 0.0
    %1511 = vmatpush1.msra.mxu0 0.0
    %1512 = vmatprep.subr.mxu0 0.0
    %1513 = vmatpush1.msra.mxu0 0.0
    %1514 = vmatprep.subr.mxu0 0.0
    %1515 = vmatpush1.msra.mxu0 0.0
    %1516 = vmatprep.subr.mxu0 0.0
    %1517 = vmatpush1.msra.mxu0 0.0
    %1518 = vmatprep.subr.mxu0 0.0
    %1519 = vmatpush1.msra.mxu0 0.0
    %1520 = vmatprep.subr.mxu0 0.0
    %1521 = vmatpush1.msra.mxu0 0.0
    %1522 = vmatprep.subr.mxu0 0.0
    %1523 = vmatpush1.msra.mxu0 0.0
    %1524 = vmatprep.subr.mxu0 0.0
    %1525 = vmatpush1.msra.mxu0 0.0
    %1526 = vmatprep.subr.mxu0 0.0
    %1527 = vmatpush1.msra.mxu0 0.0
    %1528 = vmatprep.subr.mxu0 0.0
    %1529 = vmatpush1.msra.mxu0 0.0
    %1530 = vmatprep.mubr.f32.mxu0 0.0
    %1531 = vmatmul.mubr.f32.gmra.mrb[0].mxu0 %v1464
    %v1532 = vpop.f32.mrb[0].mxu0
    %v1533 = vadd.f32 0.0, %v1532
    %v1534 = vpop.f32.mrb[0].mxu0
    %1535 = vdwg.mxu0
    %1537 = vrot.lane.b32.xlu0 %v1533, 40
    %v1538 = vpop.permute.xlu0 %1537
    %vm1540 = vcmask 392512
    %1541 = vst.msk [vmem:[#allocation15] sm:$0xff] %vm1540, %v1538
    %1542 = vrot.lane.b32.xlu0 %v1062, 64
    %v1543 = vpop.permute.xlu0 %1542
    %v1544 = vsel %vm1067, %v1543, 0
    %1546 = vmatprep.subr.mxu0 0.0
    %1547 = vmatpush1.msra.mxu0 %v1065
    %1548 = vmatprep.subr.mxu0 0.0
    %1549 = vmatpush1.msra.mxu0 %v1066
    %1550 = vmatprep.subr.mxu0 0.0
    %1551 = vmatpush1.msra.mxu0 0.0
    %1552 = vmatprep.subr.mxu0 0.0
    %1553 = vmatpush1.msra.mxu0 0.0
    %1554 = vmatprep.subr.mxu0 0.0
    %1555 = vmatpush1.msra.mxu0 0.0
    %1556 = vmatprep.subr.mxu0 0.0
    %1557 = vmatpush1.msra.mxu0 0.0
    %1558 = vmatprep.subr.mxu0 0.0
    %1559 = vmatpush1.msra.mxu0 0.0
    %1560 = vmatprep.subr.mxu0 0.0
    %1561 = vmatpush1.msra.mxu0 0.0
    %1562 = vmatprep.subr.mxu0 0.0
    %1563 = vmatpush1.msra.mxu0 0.0
    %1564 = vmatprep.subr.mxu0 0.0
    %1565 = vmatpush1.msra.mxu0 0.0
    %1566 = vmatprep.subr.mxu0 0.0
    %1567 = vmatpush1.msra.mxu0 0.0
    %1568 = vmatprep.subr.mxu0 0.0
    %1569 = vmatpush1.msra.mxu0 0.0
    %1570 = vmatprep.subr.mxu0 0.0
    %1571 = vmatpush1.msra.mxu0 0.0
    %1572 = vmatprep.subr.mxu0 0.0
    %1573 = vmatpush1.msra.mxu0 0.0
    %1574 = vmatprep.subr.mxu0 0.0
    %1575 = vmatpush1.msra.mxu0 0.0
    %1576 = vmatprep.subr.mxu0 0.0
    %1577 = vmatpush1.msra.mxu0 0.0
    %1578 = vmatprep.subr.mxu0 0.0
    %1579 = vmatpush1.msra.mxu0 0.0
    %1580 = vmatprep.subr.mxu0 0.0
    %1581 = vmatpush1.msra.mxu0 0.0
    %1582 = vmatprep.subr.mxu0 0.0
    %1583 = vmatpush1.msra.mxu0 0.0
    %1584 = vmatprep.subr.mxu0 0.0
    %1585 = vmatpush1.msra.mxu0 0.0
    %1586 = vmatprep.subr.mxu0 0.0
    %1587 = vmatpush1.msra.mxu0 0.0
    %1588 = vmatprep.subr.mxu0 0.0
    %1589 = vmatpush1.msra.mxu0 0.0
    %1590 = vmatprep.subr.mxu0 0.0
    %1591 = vmatpush1.msra.mxu0 0.0
    %1592 = vmatprep.subr.mxu0 0.0
    %1593 = vmatpush1.msra.mxu0 0.0
    %1594 = vmatprep.subr.mxu0 0.0
    %1595 = vmatpush1.msra.mxu0 0.0
    %1596 = vmatprep.subr.mxu0 0.0
    %1597 = vmatpush1.msra.mxu0 0.0
    %1598 = vmatprep.subr.mxu0 0.0
    %1599 = vmatpush1.msra.mxu0 0.0
    %1600 = vmatprep.subr.mxu0 0.0
    %1601 = vmatpush1.msra.mxu0 0.0
    %1602 = vmatprep.subr.mxu0 0.0
    %1603 = vmatpush1.msra.mxu0 0.0
    %1604 = vmatprep.subr.mxu0 0.0
    %1605 = vmatpush1.msra.mxu0 0.0
    %1606 = vmatprep.subr.mxu0 0.0
    %1607 = vmatpush1.msra.mxu0 0.0
    %1608 = vmatprep.subr.mxu0 0.0
    %1609 = vmatpush1.msra.mxu0 0.0
    %1610 = vmatprep.mubr.f32.mxu0 0.0
    %1611 = vmatmul.mubr.f32.gmra.mrb[0].mxu0 %v1544
    %v1612 = vpop.f32.mrb[0].mxu0
    %v1613 = vadd.f32 0.0, %v1612
    %v1614 = vpop.f32.mrb[0].mxu0
    %1615 = vdwg.mxu0
    %1617 = vrot.lane.b32.xlu0 %v1613, 48
    %v1618 = vpop.permute.xlu0 %1617
    %vm1620 = vcmask 458112
    %1621 = vst.msk [vmem:[#allocation15] sm:$0xff] %vm1620, %v1618
    %1622 = vrot.lane.b32.xlu0 %v1062, 32
    %v1623 = vpop.permute.xlu0 %1622
    %v1624 = vsel %vm1067, %v1623, 0
    %1626 = vmatprep.subr.mxu0 0.0
    %1627 = vmatpush1.msra.mxu0 %v1065
    %1628 = vmatprep.subr.mxu0 0.0
    %1629 = vmatpush1.msra.mxu0 %v1066
    %1630 = vmatprep.subr.mxu0 0.0
    %1631 = vmatpush1.msra.mxu0 0.0
    %1632 = vmatprep.subr.mxu0 0.0
    %1633 = vmatpush1.msra.mxu0 0.0
    %1634 = vmatprep.subr.mxu0 0.0
    %1635 = vmatpush1.msra.mxu0 0.0
    %1636 = vmatprep.subr.mxu0 0.0
    %1637 = vmatpush1.msra.mxu0 0.0
    %1638 = vmatprep.subr.mxu0 0.0
    %1639 = vmatpush1.msra.mxu0 0.0
    %1640 = vmatprep.subr.mxu0 0.0
    %1641 = vmatpush1.msra.mxu0 0.0
    %1642 = vmatprep.subr.mxu0 0.0
    %1643 = vmatpush1.msra.mxu0 0.0
    %1644 = vmatprep.subr.mxu0 0.0
    %1645 = vmatpush1.msra.mxu0 0.0
    %1646 = vmatprep.subr.mxu0 0.0
    %1647 = vmatpush1.msra.mxu0 0.0
    %1648 = vmatprep.subr.mxu0 0.0
    %1649 = vmatpush1.msra.mxu0 0.0
    %1650 = vmatprep.subr.mxu0 0.0
    %1651 = vmatpush1.msra.mxu0 0.0
    %1652 = vmatprep.subr.mxu0 0.0
    %1653 = vmatpush1.msra.mxu0 0.0
    %1654 = vmatprep.subr.mxu0 0.0
    %1655 = vmatpush1.msra.mxu0 0.0
    %1656 = vmatprep.subr.mxu0 0.0
    %1657 = vmatpush1.msra.mxu0 0.0
    %1658 = vmatprep.subr.mxu0 0.0
    %1659 = vmatpush1.msra.mxu0 0.0
    %1660 = vmatprep.subr.mxu0 0.0
    %1661 = vmatpush1.msra.mxu0 0.0
    %1662 = vmatprep.subr.mxu0 0.0
    %1663 = vmatpush1.msra.mxu0 0.0
    %1664 = vmatprep.subr.mxu0 0.0
    %1665 = vmatpush1.msra.mxu0 0.0
    %1666 = vmatprep.subr.mxu0 0.0
    %1667 = vmatpush1.msra.mxu0 0.0
    %1668 = vmatprep.subr.mxu0 0.0
    %1669 = vmatpush1.msra.mxu0 0.0
    %1670 = vmatprep.subr.mxu0 0.0
    %1671 = vmatpush1.msra.mxu0 0.0
    %1672 = vmatprep.subr.mxu0 0.0
    %1673 = vmatpush1.msra.mxu0 0.0
    %1674 = vmatprep.subr.mxu0 0.0
    %1675 = vmatpush1.msra.mxu0 0.0
    %1676 = vmatprep.subr.mxu0 0.0
    %1677 = vmatpush1.msra.mxu0 0.0
    %1678 = vmatprep.subr.mxu0 0.0
    %1679 = vmatpush1.msra.mxu0 0.0
    %1680 = vmatprep.subr.mxu0 0.0
    %1681 = vmatpush1.msra.mxu0 0.0
    %1682 = vmatprep.subr.mxu0 0.0
    %1683 = vmatpush1.msra.mxu0 0.0
    %1684 = vmatprep.subr.mxu0 0.0
    %1685 = vmatpush1.msra.mxu0 0.0
    %1686 = vmatprep.subr.mxu0 0.0
    %1687 = vmatpush1.msra.mxu0 0.0
    %1688 = vmatprep.subr.mxu0 0.0
    %1689 = vmatpush1.msra.mxu0 0.0
    %1690 = vmatprep.mubr.f32.mxu0 0.0
    %1691 = vmatmul.mubr.f32.gmra.mrb[0].mxu0 %v1624
    %v1692 = vpop.f32.mrb[0].mxu0
    %v1693 = vadd.f32 0.0, %v1692
    %v1694 = vpop.f32.mrb[0].mxu0
    %1695 = vdwg.mxu0
    %1697 = vrot.lane.b32.xlu0 %v1693, 56
    %v1698 = vpop.permute.xlu0 %1697
    %vm1700 = vcmask 523712
    %1701 = vst.msk [vmem:[#allocation15] sm:$0xff] %vm1700, %v1698
    %v1703 = vsel %vm1067, %v1063, 0
    %1705 = vmatprep.subr.mxu0 0.0
    %1706 = vmatpush1.msra.mxu0 %v1065
    %1707 = vmatprep.subr.mxu0 0.0
    %1708 = vmatpush1.msra.mxu0 %v1066
    %1709 = vmatprep.subr.mxu0 0.0
    %1710 = vmatpush1.msra.mxu0 0.0
    %1711 = vmatprep.subr.mxu0 0.0
    %1712 = vmatpush1.msra.mxu0 0.0
    %1713 = vmatprep.subr.mxu0 0.0
    %1714 = vmatpush1.msra.mxu0 0.0
    %1715 = vmatprep.subr.mxu0 0.0
    %1716 = vmatpush1.msra.mxu0 0.0
    %1717 = vmatprep.subr.mxu0 0.0
    %1718 = vmatpush1.msra.mxu0 0.0
    %1719 = vmatprep.subr.mxu0 0.0
    %1720 = vmatpush1.msra.mxu0 0.0
    %1721 = vmatprep.subr.mxu0 0.0
    %1722 = vmatpush1.msra.mxu0 0.0
    %1723 = vmatprep.subr.mxu0 0.0
    %1724 = vmatpush1.msra.mxu0 0.0
    %1725 = vmatprep.subr.mxu0 0.0
    %1726 = vmatpush1.msra.mxu0 0.0
    %1727 = vmatprep.subr.mxu0 0.0
    %1728 = vmatpush1.msra.mxu0 0.0
    %1729 = vmatprep.subr.mxu0 0.0
    %1730 = vmatpush1.msra.mxu0 0.0
    %1731 = vmatprep.subr.mxu0 0.0
    %1732 = vmatpush1.msra.mxu0 0.0
    %1733 = vmatprep.subr.mxu0 0.0
    %1734 = vmatpush1.msra.mxu0 0.0
    %1735 = vmatprep.subr.mxu0 0.0
    %1736 = vmatpush1.msra.mxu0 0.0
    %1737 = vmatprep.subr.mxu0 0.0
    %1738 = vmatpush1.msra.mxu0 0.0
    %1739 = vmatprep.subr.mxu0 0.0
    %1740 = vmatpush1.msra.mxu0 0.0
    %1741 = vmatprep.subr.mxu0 0.0
    %1742 = vmatpush1.msra.mxu0 0.0
    %1743 = vmatprep.subr.mxu0 0.0
    %1744 = vmatpush1.msra.mxu0 0.0
    %1745 = vmatprep.subr.mxu0 0.0
    %1746 = vmatpush1.msra.mxu0 0.0
    %1747 = vmatprep.subr.mxu0 0.0
    %1748 = vmatpush1.msra.mxu0 0.0
    %1749 = vmatprep.subr.mxu0 0.0
    %1750 = vmatpush1.msra.mxu0 0.0
    %1751 = vmatprep.subr.mxu0 0.0
    %1752 = vmatpush1.msra.mxu0 0.0
    %1753 = vmatprep.subr.mxu0 0.0
    %1754 = vmatpush1.msra.mxu0 0.0
    %1755 = vmatprep.subr.mxu0 0.0
    %1756 = vmatpush1.msra.mxu0 0.0
    %1757 = vmatprep.subr.mxu0 0.0
    %1758 = vmatpush1.msra.mxu0 0.0
    %1759 = vmatprep.subr.mxu0 0.0
    %1760 = vmatpush1.msra.mxu0 0.0
    %1761 = vmatprep.subr.mxu0 0.0
    %1762 = vmatpush1.msra.mxu0 0.0
    %1763 = vmatprep.subr.mxu0 0.0
    %1764 = vmatpush1.msra.mxu0 0.0
    %1765 = vmatprep.subr.mxu0 0.0
    %1766 = vmatpush1.msra.mxu0 0.0
    %1767 = vmatprep.subr.mxu0 0.0
    %1768 = vmatpush1.msra.mxu0 0.0
    %1769 = vmatprep.mubr.f32.mxu0 0.0
    %1770 = vmatmul.mubr.f32.gmra.mrb[0].mxu0 %v1703
    %v1771 = vpop.f32.mrb[0].mxu0
    %v1772 = vadd.f32 0.0, %v1771
    %v1773 = vpop.f32.mrb[0].mxu0
    %1774 = vdwg.mxu0
    %1776 = vrot.lane.b32.xlu0 %v1772, 64
    %v1777 = vpop.permute.xlu0 %1776
    %vm1779 = vcmask 589312
    %1780 = vst.msk [vmem:[#allocation15] sm:$0xff] %vm1779, %v1777
    %1781 = vrot.lane.b32.xlu0 %v1063, 96
    %v1782 = vpop.permute.xlu0 %1781
    %v1783 = vsel %vm1067, %v1782, 0
    %1785 = vmatprep.subr.mxu0 0.0
    %1786 = vmatpush1.msra.mxu0 %v1065
    %1787 = vmatprep.subr.mxu0 0.0
    %1788 = vmatpush1.msra.mxu0 %v1066
    %1789 = vmatprep.subr.mxu0 0.0
    %1790 = vmatpush1.msra.mxu0 0.0
    %1791 = vmatprep.subr.mxu0 0.0
    %1792 = vmatpush1.msra.mxu0 0.0
    %1793 = vmatprep.subr.mxu0 0.0
    %1794 = vmatpush1.msra.mxu0 0.0
    %1795 = vmatprep.subr.mxu0 0.0
    %1796 = vmatpush1.msra.mxu0 0.0
    %1797 = vmatprep.subr.mxu0 0.0
    %1798 = vmatpush1.msra.mxu0 0.0
    %1799 = vmatprep.subr.mxu0 0.0
    %1800 = vmatpush1.msra.mxu0 0.0
    %1801 = vmatprep.subr.mxu0 0.0
    %1802 = vmatpush1.msra.mxu0 0.0
    %1803 = vmatprep.subr.mxu0 0.0
    %1804 = vmatpush1.msra.mxu0 0.0
    %1805 = vmatprep.subr.mxu0 0.0
    %1806 = vmatpush1.msra.mxu0 0.0
    %1807 = vmatprep.subr.mxu0 0.0
    %1808 = vmatpush1.msra.mxu0 0.0
    %1809 = vmatprep.subr.mxu0 0.0
    %1810 = vmatpush1.msra.mxu0 0.0
    %1811 = vmatprep.subr.mxu0 0.0
    %1812 = vmatpush1.msra.mxu0 0.0
    %1813 = vmatprep.subr.mxu0 0.0
    %1814 = vmatpush1.msra.mxu0 0.0
    %1815 = vmatprep.subr.mxu0 0.0
    %1816 = vmatpush1.msra.mxu0 0.0
    %1817 = vmatprep.subr.mxu0 0.0
    %1818 = vmatpush1.msra.mxu0 0.0
    %1819 = vmatprep.subr.mxu0 0.0
    %1820 = vmatpush1.msra.mxu0 0.0
    %1821 = vmatprep.subr.mxu0 0.0
    %1822 = vmatpush1.msra.mxu0 0.0
    %1823 = vmatprep.subr.mxu0 0.0
    %1824 = vmatpush1.msra.mxu0 0.0
    %1825 = vmatprep.subr.mxu0 0.0
    %1826 = vmatpush1.msra.mxu0 0.0
    %1827 = vmatprep.subr.mxu0 0.0
    %1828 = vmatpush1.msra.mxu0 0.0
    %1829 = vmatprep.subr.mxu0 0.0
    %1830 = vmatpush1.msra.mxu0 0.0
    %1831 = vmatprep.subr.mxu0 0.0
    %1832 = vmatpush1.msra.mxu0 0.0
    %1833 = vmatprep.subr.mxu0 0.0
    %1834 = vmatpush1.msra.mxu0 0.0
    %1835 = vmatprep.subr.mxu0 0.0
    %1836 = vmatpush1.msra.mxu0 0.0
    %1837 = vmatprep.subr.mxu0 0.0
    %1838 = vmatpush1.msra.mxu0 0.0
    %1839 = vmatprep.subr.mxu0 0.0
    %1840 = vmatpush1.msra.mxu0 0.0
    %1841 = vmatprep.subr.mxu0 0.0
    %1842 = vmatpush1.msra.mxu0 0.0
    %1843 = vmatprep.subr.mxu0 0.0
    %1844 = vmatpush1.msra.mxu0 0.0
    %1845 = vmatprep.subr.mxu0 0.0
    %1846 = vmatpush1.msra.mxu0 0.0
    %1847 = vmatprep.subr.mxu0 0.0
    %1848 = vmatpush1.msra.mxu0 0.0
    %1849 = vmatprep.mubr.f32.mxu0 0.0
    %1850 = vmatmul.mubr.f32.gmra.mrb[0].mxu0 %v1783
    %v1851 = vpop.f32.mrb[0].mxu0
    %v1852 = vadd.f32 0.0, %v1851
    %v1853 = vpop.f32.mrb[0].mxu0
    %1854 = vdwg.mxu0
    %1856 = vrot.lane.b32.xlu0 %v1852, 72
    %v1857 = vpop.permute.xlu0 %1856
    %vm1859 = vcmask 654912
    %1860 = vst.msk [vmem:[#allocation15] sm:$0xff] %vm1859, %v1857
    %1861 = vrot.lane.b32.xlu0 %v1063, 64
    %v1862 = vpop.permute.xlu0 %1861
    %v1863 = vsel %vm1067, %v1862, 0
    %1865 = vmatprep.subr.mxu0 0.0
    %1866 = vmatpush1.msra.mxu0 %v1065
    %1867 = vmatprep.subr.mxu0 0.0
    %1868 = vmatpush1.msra.mxu0 %v1066
    %1869 = vmatprep.subr.mxu0 0.0
    %1870 = vmatpush1.msra.mxu0 0.0
    %1871 = vmatprep.subr.mxu0 0.0
    %1872 = vmatpush1.msra.mxu0 0.0
    %1873 = vmatprep.subr.mxu0 0.0
    %1874 = vmatpush1.msra.mxu0 0.0
    %1875 = vmatprep.subr.mxu0 0.0
    %1876 = vmatpush1.msra.mxu0 0.0
    %1877 = vmatprep.subr.mxu0 0.0
    %1878 = vmatpush1.msra.mxu0 0.0
    %1879 = vmatprep.subr.mxu0 0.0
    %1880 = vmatpush1.msra.mxu0 0.0
    %1881 = vmatprep.subr.mxu0 0.0
    %1882 = vmatpush1.msra.mxu0 0.0
    %1883 = vmatprep.subr.mxu0 0.0
    %1884 = vmatpush1.msra.mxu0 0.0
    %1885 = vmatprep.subr.mxu0 0.0
    %1886 = vmatpush1.msra.mxu0 0.0
    %1887 = vmatprep.subr.mxu0 0.0
    %1888 = vmatpush1.msra.mxu0 0.0
    %1889 = vmatprep.subr.mxu0 0.0
    %1890 = vmatpush1.msra.mxu0 0.0
    %1891 = vmatprep.subr.mxu0 0.0
    %1892 = vmatpush1.msra.mxu0 0.0
    %1893 = vmatprep.subr.mxu0 0.0
    %1894 = vmatpush1.msra.mxu0 0.0
    %1895 = vmatprep.subr.mxu0 0.0
    %1896 = vmatpush1.msra.mxu0 0.0
    %1897 = vmatprep.subr.mxu0 0.0
    %1898 = vmatpush1.msra.mxu0 0.0
    %1899 = vmatprep.subr.mxu0 0.0
    %1900 = vmatpush1.msra.mxu0 0.0
    %1901 = vmatprep.subr.mxu0 0.0
    %1902 = vmatpush1.msra.mxu0 0.0
    %1903 = vmatprep.subr.mxu0 0.0
    %1904 = vmatpush1.msra.mxu0 0.0
    %1905 = vmatprep.subr.mxu0 0.0
    %1906 = vmatpush1.msra.mxu0 0.0
    %1907 = vmatprep.subr.mxu0 0.0
    %1908 = vmatpush1.msra.mxu0 0.0
    %1909 = vmatprep.subr.mxu0 0.0
    %1910 = vmatpush1.msra.mxu0 0.0
    %1911 = vmatprep.subr.mxu0 0.0
    %1912 = vmatpush1.msra.mxu0 0.0
    %1913 = vmatprep.subr.mxu0 0.0
    %1914 = vmatpush1.msra.mxu0 0.0
    %1915 = vmatprep.subr.mxu0 0.0
    %1916 = vmatpush1.msra.mxu0 0.0
    %1917 = vmatprep.subr.mxu0 0.0
    %1918 = vmatpush1.msra.mxu0 0.0
    %1919 = vmatprep.subr.mxu0 0.0
    %1920 = vmatpush1.msra.mxu0 0.0
    %1921 = vmatprep.subr.mxu0 0.0
    %1922 = vmatpush1.msra.mxu0 0.0
    %1923 = vmatprep.subr.mxu0 0.0
    %1924 = vmatpush1.msra.mxu0 0.0
    %1925 = vmatprep.subr.mxu0 0.0
    %1926 = vmatpush1.msra.mxu0 0.0
    %1927 = vmatprep.subr.mxu0 0.0
    %1928 = vmatpush1.msra.mxu0 0.0
    %1929 = vmatprep.mubr.f32.mxu0 0.0
    %1930 = vmatmul.mubr.f32.gmra.mrb[0].mxu0 %v1863
    %v1931 = vpop.f32.mrb[0].mxu0
    %v1932 = vadd.f32 0.0, %v1931
    %v1933 = vpop.f32.mrb[0].mxu0
    %1934 = vdwg.mxu0
    %1936 = vrot.lane.b32.xlu0 %v1932, 80
    %v1937 = vpop.permute.xlu0 %1936
    %vm1939 = vcmask 720512
    %1940 = vst.msk [vmem:[#allocation15] sm:$0xff] %vm1939, %v1937
    %1941 = vrot.lane.b32.xlu0 %v1063, 32
    %v1942 = vpop.permute.xlu0 %1941
    %v1943 = vsel %vm1067, %v1942, 0
    %1945 = vmatprep.subr.mxu0 0.0
    %1946 = vmatpush1.msra.mxu0 %v1065
    %1947 = vmatprep.subr.mxu0 0.0
    %1948 = vmatpush1.msra.mxu0 %v1066
    %1949 = vmatprep.subr.mxu0 0.0
    %1950 = vmatpush1.msra.mxu0 0.0
    %1951 = vmatprep.subr.mxu0 0.0
    %1952 = vmatpush1.msra.mxu0 0.0
    %1953 = vmatprep.subr.mxu0 0.0
    %1954 = vmatpush1.msra.mxu0 0.0
    %1955 = vmatprep.subr.mxu0 0.0
    %1956 = vmatpush1.msra.mxu0 0.0
    %1957 = vmatprep.subr.mxu0 0.0
    %1958 = vmatpush1.msra.mxu0 0.0
    %1959 = vmatprep.subr.mxu0 0.0
    %1960 = vmatpush1.msra.mxu0 0.0
    %1961 = vmatprep.subr.mxu0 0.0
    %1962 = vmatpush1.msra.mxu0 0.0
    %1963 = vmatprep.subr.mxu0 0.0
    %1964 = vmatpush1.msra.mxu0 0.0
    %1965 = vmatprep.subr.mxu0 0.0
    %1966 = vmatpush1.msra.mxu0 0.0
    %1967 = vmatprep.subr.mxu0 0.0
    %1968 = vmatpush1.msra.mxu0 0.0
    %1969 = vmatprep.subr.mxu0 0.0
    %1970 = vmatpush1.msra.mxu0 0.0
    %1971 = vmatprep.subr.mxu0 0.0
    %1972 = vmatpush1.msra.mxu0 0.0
    %1973 = vmatprep.subr.mxu0 0.0
    %1974 = vmatpush1.msra.mxu0 0.0
    %1975 = vmatprep.subr.mxu0 0.0
    %1976 = vmatpush1.msra.mxu0 0.0
    %1977 = vmatprep.subr.mxu0 0.0
    %1978 = vmatpush1.msra.mxu0 0.0
    %1979 = vmatprep.subr.mxu0 0.0
    %1980 = vmatpush1.msra.mxu0 0.0
    %1981 = vmatprep.subr.mxu0 0.0
    %1982 = vmatpush1.msra.mxu0 0.0
    %1983 = vmatprep.subr.mxu0 0.0
    %1984 = vmatpush1.msra.mxu0 0.0
    %1985 = vmatprep.subr.mxu0 0.0
    %1986 = vmatpush1.msra.mxu0 0.0
    %1987 = vmatprep.subr.mxu0 0.0
    %1988 = vmatpush1.msra.mxu0 0.0
    %1989 = vmatprep.subr.mxu0 0.0
    %1990 = vmatpush1.msra.mxu0 0.0
    %1991 = vmatprep.subr.mxu0 0.0
    %1992 = vmatpush1.msra.mxu0 0.0
    %1993 = vmatprep.subr.mxu0 0.0
    %1994 = vmatpush1.msra.mxu0 0.0
    %1995 = vmatprep.subr.mxu0 0.0
    %1996 = vmatpush1.msra.mxu0 0.0
    %1997 = vmatprep.subr.mxu0 0.0
    %1998 = vmatpush1.msra.mxu0 0.0
    %1999 = vmatprep.subr.mxu0 0.0
    %2000 = vmatpush1.msra.mxu0 0.0
    %2001 = vmatprep.subr.mxu0 0.0
    %2002 = vmatpush1.msra.mxu0 0.0
    %2003 = vmatprep.subr.mxu0 0.0
    %2004 = vmatpush1.msra.mxu0 0.0
    %2005 = vmatprep.subr.mxu0 0.0
    %2006 = vmatpush1.msra.mxu0 0.0
    %2007 = vmatprep.subr.mxu0 0.0
    %2008 = vmatpush1.msra.mxu0 0.0
    %2009 = vmatprep.mubr.f32.mxu0 0.0
    %2010 = vmatmul.mubr.f32.gmra.mrb[0].mxu0 %v1943
    %v2011 = vpop.f32.mrb[0].mxu0
    %v2012 = vadd.f32 0.0, %v2011
    %v2013 = vpop.f32.mrb[0].mxu0
    %2014 = vdwg.mxu0
    %2016 = vrot.lane.b32.xlu0 %v2012, 88
    %v2017 = vpop.permute.xlu0 %2016
    %vm2019 = vcmask 786112
    %2020 = vst.msk [vmem:[#allocation15] sm:$0xff] %vm2019, %v2017
    %v2022 = vsel %vm1067, %v1064, 0
    %2024 = vmatprep.subr.mxu0 0.0
    %2025 = vmatpush1.msra.mxu0 %v1065
    %2026 = vmatprep.subr.mxu0 0.0
    %2027 = vmatpush1.msra.mxu0 %v1066
    %2028 = vmatprep.subr.mxu0 0.0
    %2029 = vmatpush1.msra.mxu0 0.0
    %2030 = vmatprep.subr.mxu0 0.0
    %2031 = vmatpush1.msra.mxu0 0.0
    %2032 = vmatprep.subr.mxu0 0.0
    %2033 = vmatpush1.msra.mxu0 0.0
    %2034 = vmatprep.subr.mxu0 0.0
    %2035 = vmatpush1.msra.mxu0 0.0
    %2036 = vmatprep.subr.mxu0 0.0
    %2037 = vmatpush1.msra.mxu0 0.0
    %2038 = vmatprep.subr.mxu0 0.0
    %2039 = vmatpush1.msra.mxu0 0.0
    %2040 = vmatprep.subr.mxu0 0.0
    %2041 = vmatpush1.msra.mxu0 0.0
    %2042 = vmatprep.subr.mxu0 0.0
    %2043 = vmatpush1.msra.mxu0 0.0
    %2044 = vmatprep.subr.mxu0 0.0
    %2045 = vmatpush1.msra.mxu0 0.0
    %2046 = vmatprep.subr.mxu0 0.0
    %2047 = vmatpush1.msra.mxu0 0.0
    %2048 = vmatprep.subr.mxu0 0.0
    %2049 = vmatpush1.msra.mxu0 0.0
    %2050 = vmatprep.subr.mxu0 0.0
    %2051 = vmatpush1.msra.mxu0 0.0
    %2052 = vmatprep.subr.mxu0 0.0
    %2053 = vmatpush1.msra.mxu0 0.0
    %2054 = vmatprep.subr.mxu0 0.0
    %2055 = vmatpush1.msra.mxu0 0.0
    %2056 = vmatprep.subr.mxu0 0.0
    %2057 = vmatpush1.msra.mxu0 0.0
    %2058 = vmatprep.subr.mxu0 0.0
    %2059 = vmatpush1.msra.mxu0 0.0
    %2060 = vmatprep.subr.mxu0 0.0
    %2061 = vmatpush1.msra.mxu0 0.0
    %2062 = vmatprep.subr.mxu0 0.0
    %2063 = vmatpush1.msra.mxu0 0.0
    %2064 = vmatprep.subr.mxu0 0.0
    %2065 = vmatpush1.msra.mxu0 0.0
    %2066 = vmatprep.subr.mxu0 0.0
    %2067 = vmatpush1.msra.mxu0 0.0
    %2068 = vmatprep.subr.mxu0 0.0
    %2069 = vmatpush1.msra.mxu0 0.0
    %2070 = vmatprep.subr.mxu0 0.0
    %2071 = vmatpush1.msra.mxu0 0.0
    %2072 = vmatprep.subr.mxu0 0.0
    %2073 = vmatpush1.msra.mxu0 0.0
    %2074 = vmatprep.subr.mxu0 0.0
    %2075 = vmatpush1.msra.mxu0 0.0
    %2076 = vmatprep.subr.mxu0 0.0
    %2077 = vmatpush1.msra.mxu0 0.0
    %2078 = vmatprep.subr.mxu0 0.0
    %2079 = vmatpush1.msra.mxu0 0.0
    %2080 = vmatprep.subr.mxu0 0.0
    %2081 = vmatpush1.msra.mxu0 0.0
    %2082 = vmatprep.subr.mxu0 0.0
    %2083 = vmatpush1.msra.mxu0 0.0
    %2084 = vmatprep.subr.mxu0 0.0
    %2085 = vmatpush1.msra.mxu0 0.0
    %2086 = vmatprep.subr.mxu0 0.0
    %2087 = vmatpush1.msra.mxu0 0.0
    %2088 = vmatprep.mubr.f32.mxu0 0.0
    %2089 = vmatmul.mubr.f32.gmra.mrb[0].mxu0 %v2022
    %v2090 = vpop.f32.mrb[0].mxu0
    %v2091 = vadd.f32 0.0, %v2090
    %v2092 = vpop.f32.mrb[0].mxu0
    %2093 = vdwg.mxu0
    %2095 = vrot.lane.b32.xlu0 %v2091, 96
    %v2096 = vpop.permute.xlu0 %2095
    %vm2098 = vcmask 851712
    %2099 = vst.msk [vmem:[#allocation15] sm:$0xff] %vm2098, %v2096
    %2100 = vrot.lane.b32.xlu0 %v1064, 96
    %v2101 = vpop.permute.xlu0 %2100
    %v2102 = vsel %vm1067, %v2101, 0
    %2104 = vmatprep.subr.mxu0 0.0
    %2105 = vmatpush1.msra.mxu0 %v1065
    %2106 = vmatprep.subr.mxu0 0.0
    %2107 = vmatpush1.msra.mxu0 %v1066
    %2108 = vmatprep.subr.mxu0 0.0
    %2109 = vmatpush1.msra.mxu0 0.0
    %2110 = vmatprep.subr.mxu0 0.0
    %2111 = vmatpush1.msra.mxu0 0.0
    %2112 = vmatprep.subr.mxu0 0.0
    %2113 = vmatpush1.msra.mxu0 0.0
    %2114 = vmatprep.subr.mxu0 0.0
    %2115 = vmatpush1.msra.mxu0 0.0
    %2116 = vmatprep.subr.mxu0 0.0
    %2117 = vmatpush1.msra.mxu0 0.0
    %2118 = vmatprep.subr.mxu0 0.0
    %2119 = vmatpush1.msra.mxu0 0.0
    %2120 = vmatprep.subr.mxu0 0.0
    %2121 = vmatpush1.msra.mxu0 0.0
    %2122 = vmatprep.subr.mxu0 0.0
    %2123 = vmatpush1.msra.mxu0 0.0
    %2124 = vmatprep.subr.mxu0 0.0
    %2125 = vmatpush1.msra.mxu0 0.0
    %2126 = vmatprep.subr.mxu0 0.0
    %2127 = vmatpush1.msra.mxu0 0.0
    %2128 = vmatprep.subr.mxu0 0.0
    %2129 = vmatpush1.msra.mxu0 0.0
    %2130 = vmatprep.subr.mxu0 0.0
    %2131 = vmatpush1.msra.mxu0 0.0
    %2132 = vmatprep.subr.mxu0 0.0
    %2133 = vmatpush1.msra.mxu0 0.0
    %2134 = vmatprep.subr.mxu0 0.0
    %2135 = vmatpush1.msra.mxu0 0.0
    %2136 = vmatprep.subr.mxu0 0.0
    %2137 = vmatpush1.msra.mxu0 0.0
    %2138 = vmatprep.subr.mxu0 0.0
    %2139 = vmatpush1.msra.mxu0 0.0
    %2140 = vmatprep.subr.mxu0 0.0
    %2141 = vmatpush1.msra.mxu0 0.0
    %2142 = vmatprep.subr.mxu0 0.0
    %2143 = vmatpush1.msra.mxu0 0.0
    %2144 = vmatprep.subr.mxu0 0.0
    %2145 = vmatpush1.msra.mxu0 0.0
    %2146 = vmatprep.subr.mxu0 0.0
    %2147 = vmatpush1.msra.mxu0 0.0
    %2148 = vmatprep.subr.mxu0 0.0
    %2149 = vmatpush1.msra.mxu0 0.0
    %2150 = vmatprep.subr.mxu0 0.0
    %2151 = vmatpush1.msra.mxu0 0.0
    %2152 = vmatprep.subr.mxu0 0.0
    %2153 = vmatpush1.msra.mxu0 0.0
    %2154 = vmatprep.subr.mxu0 0.0
    %2155 = vmatpush1.msra.mxu0 0.0
    %2156 = vmatprep.subr.mxu0 0.0
    %2157 = vmatpush1.msra.mxu0 0.0
    %2158 = vmatprep.subr.mxu0 0.0
    %2159 = vmatpush1.msra.mxu0 0.0
    %2160 = vmatprep.subr.mxu0 0.0
    %2161 = vmatpush1.msra.mxu0 0.0
    %2162 = vmatprep.subr.mxu0 0.0
    %2163 = vmatpush1.msra.mxu0 0.0
    %2164 = vmatprep.subr.mxu0 0.0
    %2165 = vmatpush1.msra.mxu0 0.0
    %2166 = vmatprep.subr.mxu0 0.0
    %2167 = vmatpush1.msra.mxu0 0.0
    %2168 = vmatprep.mubr.f32.mxu0 0.0
    %2169 = vmatmul.mubr.f32.gmra.mrb[0].mxu0 %v2102
    %v2170 = vpop.f32.mrb[0].mxu0
    %v2171 = vadd.f32 0.0, %v2170
    %v2172 = vpop.f32.mrb[0].mxu0
    %2173 = vdwg.mxu0
    %2175 = vrot.lane.b32.xlu0 %v2171, 104
    %v2176 = vpop.permute.xlu0 %2175
    %vm2178 = vcmask 917312
    %2179 = vst.msk [vmem:[#allocation15] sm:$0xff] %vm2178, %v2176
    %2180 = vrot.lane.b32.xlu0 %v1064, 64
    %v2181 = vpop.permute.xlu0 %2180
    %v2182 = vsel %vm1067, %v2181, 0
    %2184 = vmatprep.subr.mxu0 0.0
    %2185 = vmatpush1.msra.mxu0 %v1065
    %2186 = vmatprep.subr.mxu0 0.0
    %2187 = vmatpush1.msra.mxu0 %v1066
    %2188 = vmatprep.subr.mxu0 0.0
    %2189 = vmatpush1.msra.mxu0 0.0
    %2190 = vmatprep.subr.mxu0 0.0
    %2191 = vmatpush1.msra.mxu0 0.0
    %2192 = vmatprep.subr.mxu0 0.0
    %2193 = vmatpush1.msra.mxu0 0.0
    %2194 = vmatprep.subr.mxu0 0.0
    %2195 = vmatpush1.msra.mxu0 0.0
    %2196 = vmatprep.subr.mxu0 0.0
    %2197 = vmatpush1.msra.mxu0 0.0
    %2198 = vmatprep.subr.mxu0 0.0
    %2199 = vmatpush1.msra.mxu0 0.0
    %2200 = vmatprep.subr.mxu0 0.0
    %2201 = vmatpush1.msra.mxu0 0.0
    %2202 = vmatprep.subr.mxu0 0.0
    %2203 = vmatpush1.msra.mxu0 0.0
    %2204 = vmatprep.subr.mxu0 0.0
    %2205 = vmatpush1.msra.mxu0 0.0
    %2206 = vmatprep.subr.mxu0 0.0
    %2207 = vmatpush1.msra.mxu0 0.0
    %2208 = vmatprep.subr.mxu0 0.0
    %2209 = vmatpush1.msra.mxu0 0.0
    %2210 = vmatprep.subr.mxu0 0.0
    %2211 = vmatpush1.msra.mxu0 0.0
    %2212 = vmatprep.subr.mxu0 0.0
    %2213 = vmatpush1.msra.mxu0 0.0
    %2214 = vmatprep.subr.mxu0 0.0
    %2215 = vmatpush1.msra.mxu0 0.0
    %2216 = vmatprep.subr.mxu0 0.0
    %2217 = vmatpush1.msra.mxu0 0.0
    %2218 = vmatprep.subr.mxu0 0.0
    %2219 = vmatpush1.msra.mxu0 0.0
    %2220 = vmatprep.subr.mxu0 0.0
    %2221 = vmatpush1.msra.mxu0 0.0
    %2222 = vmatprep.subr.mxu0 0.0
    %2223 = vmatpush1.msra.mxu0 0.0
    %2224 = vmatprep.subr.mxu0 0.0
    %2225 = vmatpush1.msra.mxu0 0.0
    %2226 = vmatprep.subr.mxu0 0.0
    %2227 = vmatpush1.msra.mxu0 0.0
    %2228 = vmatprep.subr.mxu0 0.0
    %2229 = vmatpush1.msra.mxu0 0.0
    %2230 = vmatprep.subr.mxu0 0.0
    %2231 = vmatpush1.msra.mxu0 0.0
    %2232 = vmatprep.subr.mxu0 0.0
    %2233 = vmatpush1.msra.mxu0 0.0
    %2234 = vmatprep.subr.mxu0 0.0
    %2235 = vmatpush1.msra.mxu0 0.0
    %2236 = vmatprep.subr.mxu0 0.0
    %2237 = vmatpush1.msra.mxu0 0.0
    %2238 = vmatprep.subr.mxu0 0.0
    %2239 = vmatpush1.msra.mxu0 0.0
    %2240 = vmatprep.subr.mxu0 0.0
    %2241 = vmatpush1.msra.mxu0 0.0
    %2242 = vmatprep.subr.mxu0 0.0
    %2243 = vmatpush1.msra.mxu0 0.0
    %2244 = vmatprep.subr.mxu0 0.0
    %2245 = vmatpush1.msra.mxu0 0.0
    %2246 = vmatprep.subr.mxu0 0.0
    %2247 = vmatpush1.msra.mxu0 0.0
    %2248 = vmatprep.mubr.f32.mxu0 0.0
    %2249 = vmatmul.mubr.f32.gmra.mrb[0].mxu0 %v2182
    %v2250 = vpop.f32.mrb[0].mxu0
    %v2251 = vadd.f32 0.0, %v2250
    %v2252 = vpop.f32.mrb[0].mxu0
    %2253 = vdwg.mxu0
    %2255 = vrot.lane.b32.xlu0 %v2251, 112
    %v2256 = vpop.permute.xlu0 %2255
    %vm2258 = vcmask 982912
    %2259 = vst.msk [vmem:[#allocation15] sm:$0xff] %vm2258, %v2256
    %2260 = vrot.lane.b32.xlu0 %v1064, 32
    %v2261 = vpop.permute.xlu0 %2260
    %v2262 = vsel %vm1067, %v2261, 0
    %2264 = vmatprep.subr.mxu0 0.0
    %2265 = vmatpush1.msra.mxu0 %v1065
    %2266 = vmatprep.subr.mxu0 0.0
    %2267 = vmatpush1.msra.mxu0 %v1066
    %2268 = vmatprep.subr.mxu0 0.0
    %2269 = vmatpush1.msra.mxu0 0.0
    %2270 = vmatprep.subr.mxu0 0.0
    %2271 = vmatpush1.msra.mxu0 0.0
    %2272 = vmatprep.subr.mxu0 0.0
    %2273 = vmatpush1.msra.mxu0 0.0
    %2274 = vmatprep.subr.mxu0 0.0
    %2275 = vmatpush1.msra.mxu0 0.0
    %2276 = vmatprep.subr.mxu0 0.0
    %2277 = vmatpush1.msra.mxu0 0.0
    %2278 = vmatprep.subr.mxu0 0.0
    %2279 = vmatpush1.msra.mxu0 0.0
    %2280 = vmatprep.subr.mxu0 0.0
    %2281 = vmatpush1.msra.mxu0 0.0
    %2282 = vmatprep.subr.mxu0 0.0
    %2283 = vmatpush1.msra.mxu0 0.0
    %2284 = vmatprep.subr.mxu0 0.0
    %2285 = vmatpush1.msra.mxu0 0.0
    %2286 = vmatprep.subr.mxu0 0.0
    %2287 = vmatpush1.msra.mxu0 0.0
    %2288 = vmatprep.subr.mxu0 0.0
    %2289 = vmatpush1.msra.mxu0 0.0
    %2290 = vmatprep.subr.mxu0 0.0
    %2291 = vmatpush1.msra.mxu0 0.0
    %2292 = vmatprep.subr.mxu0 0.0
    %2293 = vmatpush1.msra.mxu0 0.0
    %2294 = vmatprep.subr.mxu0 0.0
    %2295 = vmatpush1.msra.mxu0 0.0
    %2296 = vmatprep.subr.mxu0 0.0
    %2297 = vmatpush1.msra.mxu0 0.0
    %2298 = vmatprep.subr.mxu0 0.0
    %2299 = vmatpush1.msra.mxu0 0.0
    %2300 = vmatprep.subr.mxu0 0.0
    %2301 = vmatpush1.msra.mxu0 0.0
    %2302 = vmatprep.subr.mxu0 0.0
    %2303 = vmatpush1.msra.mxu0 0.0
    %2304 = vmatprep.subr.mxu0 0.0
    %2305 = vmatpush1.msra.mxu0 0.0
    %2306 = vmatprep.subr.mxu0 0.0
    %2307 = vmatpush1.msra.mxu0 0.0
    %2308 = vmatprep.subr.mxu0 0.0
    %2309 = vmatpush1.msra.mxu0 0.0
    %2310 = vmatprep.subr.mxu0 0.0
    %2311 = vmatpush1.msra.mxu0 0.0
    %2312 = vmatprep.subr.mxu0 0.0
    %2313 = vmatpush1.msra.mxu0 0.0
    %2314 = vmatprep.subr.mxu0 0.0
    %2315 = vmatpush1.msra.mxu0 0.0
    %2316 = vmatprep.subr.mxu0 0.0
    %2317 = vmatpush1.msra.mxu0 0.0
    %2318 = vmatprep.subr.mxu0 0.0
    %2319 = vmatpush1.msra.mxu0 0.0
    %2320 = vmatprep.subr.mxu0 0.0
    %2321 = vmatpush1.msra.mxu0 0.0
    %2322 = vmatprep.subr.mxu0 0.0
    %2323 = vmatpush1.msra.mxu0 0.0
    %2324 = vmatprep.subr.mxu0 0.0
    %2325 = vmatpush1.msra.mxu0 0.0
    %2326 = vmatprep.subr.mxu0 0.0
    %2327 = vmatpush1.msra.mxu0 0.0
    %2328 = vmatprep.mubr.f32.mxu0 0.0
    %2329 = vmatmul.mubr.f32.gmra.mrb[0].mxu0 %v2262
    %v2330 = vpop.f32.mrb[0].mxu0
    %v2331 = vadd.f32 0.0, %v2330
    %v2332 = vpop.f32.mrb[0].mxu0
    %2333 = vdwg.mxu0
    %2335 = vrot.lane.b32.xlu0 %v2331, 120
    %v2336 = vpop.permute.xlu0 %2335
    %vm2338 = vcmask 1048512
    %2339 = vst.msk [vmem:[#allocation15] sm:$0xff] %vm2338, %v2336
    // Predicated region
    $region58: #{tpu_custom_call.1} parent=1 // pred_check
      _
    $region59: #{tpu_custom_call.1} parent=1 // pred_check_branch
      %2341 = sbr.rel (0) target = $region61
    $region60: #{tpu_custom_call.1} parent=1 // pred_region
      %s2343 = ssub.s32 128, 128
      %2344 = vsyncadd [#allocation5], %s2343
      %s2346 = sshll.u32 [#allocation15], 4
      %s2347 = int_to_ptr.vmem [resolvable:$true] %s2346
      %2349 = dma.vmem_to_hbm [thread:$0]  %s2347, 128, %s7, [#allocation5]
    $region61: #{tpu_custom_call.1} parent=1 // pred_fallthru
      _
    // Predicated region
    $region62: #{tpu_custom_call.1} parent=1 // pred_check
      _
    $region63: #{tpu_custom_call.1} parent=1 // pred_check_branch
      %2351 = sbr.rel (0) target = $region65
    $region64: #{tpu_custom_call.1} parent=1 // pred_region
      %2352 = dma.done [#allocation5], 128
    $region65: #{tpu_custom_call.1} parent=1 // pred_fallthru
      _
    %2353 = vsyncpa [#allocation4], 1
    %2354 = vsyncpa [#allocation7], 1
    %2355 = vsyncpa [#allocation10], 1
    %2356 = vsyncpa [#allocation13], 1
    %2357 = vsyncpa [#allocation5], 1

</llo_original>
